<compile_context>
chip_gen: v6e
topology: v6e:2x2x1
jax: 0.10.0
libtpu: 0.0.40
codegen_flags: <defaults>
</compile_context>

<pallas_src>
import jax
import jax.numpy as jnp
from jax import lax
from jax.experimental import pallas as pl
from jax.experimental.pallas import tpu as pltpu

# ----------------------- model hyperparameters ------------------------------
HIDDEN_SIZE = 64
NUM_JOINTS = 17
NUM_COORDS = 3
INPUT_SIZE = NUM_JOINTS * NUM_COORDS  # 51
# TODO(synk): num_classes comes from listing ./athlete_videos_processed in the
# original script; use a fixed synthetic value here.
NUM_CLASSES = 5

LANE = 128
SUBLANE = 8
BB_MAX = 512        # max batch rows per block (keeps gx scratch << VMEM limit)
T_CHUNK_MAX = 16    # time steps whose input projection is hoisted per grid step


def _round_up(x, m):
    return (x + m - 1) // m * m


# ----------------------------- Pallas kernel --------------------------------
def _make_kernel(seq_len, t_chunk, mask_last_chunk, inner_unroll):
    """Builds the LSTM+FC kernel for a fixed (static) time chunking."""

    def kernel(x_ref, wih_ref, whh_ref, b_ref, fcw_ref, fcb_ref, out_ref,
               gx_ref, h_ref, c_ref):
        # x_ref  : (T_CHUNK*BB, I) bf16 — rows ordered (t, b) within the chunk
        # wih_ref: (I, 4H) bf16, gate columns [i | f | o | g]
        # whh_ref: (H, 4H) bf16, same column order
        # b_ref  : (1, 4H) f32 (= b_ih + b_hh, reordered)
        # fcw_ref: (H, Cpad) bf16, fcb_ref: (1, Cpad) f32
        # out_ref: (BB, Cpad) f32
        # gx_ref : (T_CHUNK*BB, 4H) f32 scratch; h_ref/c_ref: (BB, H) f32 carry
        TB = x_ref.shape[0]
        BB = TB // t_chunk
        H = whh_ref.shape[0]
        t_idx = pl.program_id(1)

        @pl.when(t_idx == 0)
        def _():
            h_ref[...] = jnp.zeros_like(h_ref)
            c_ref[...] = jnp.zeros_like(c_ref)

        # Hoisted input projection for the whole chunk: one MXU matmul + bias,
        # off the h->h critical path.  x is already bf16 (cast in the wrapper).
        gx_ref[...] = (jnp.dot(x_ref[...], wih_ref[...],
                               preferred_element_type=jnp.float32)
                       + b_ref[...])

        whh = whh_ref[...]

        def step(t, carry):
            h, c = carry
            row = pl.multiple_of(t * BB, SUBLANE)
            gates = gx_ref[pl.ds(row, BB), :] + jnp.dot(
                h.astype(jnp.bfloat16), whh,
                preferred_element_type=jnp.float32)
            # gate columns [i | f | o | g]: one sigmoid + one tanh per step.
            sig = jax.nn.sigmoid(gates[:, :3 * H])
            g_g = jnp.tanh(gates[:, 3 * H:])
            i_g = sig[:, 0 * H:1 * H]
            f_g = sig[:, 1 * H:2 * H]
            o_g = sig[:, 2 * H:3 * H]
            c_new = f_g * c + i_g * g_g
            h_new = o_g * jnp.tanh(c_new)
            if mask_last_chunk:
                valid = (t_idx * t_chunk + t) < seq_len
                h_new = jnp.where(valid, h_new, h)
                c_new = jnp.where(valid, c_new, c)
            return h_new, c_new

        h, c = lax.fori_loop(0, t_chunk, step, (h_ref[...], c_ref[...]),
                             unroll=inner_unroll)
        h_ref[...] = h
        c_ref[...] = c

        # ---- FC head at the last time chunk, lane-dense store ---------------
        @pl.when(t_idx == pl.num_programs(1) - 1)
        def _():
            out_ref[...] = (jnp.dot(h.astype(jnp.bfloat16), fcw_ref[...],
                                    preferred_element_type=jnp.float32)
                            + fcb_ref[...])

    return kernel


# -------------------- one-time weight packing (hoisted) ----------------------
def prepare_params(params):
    """Pack PyTorch-layout LSTM/Linear weights for the kernel (call once)."""
    H = params["w_hh"].shape[1]
    num_classes = params["fc_b"].shape[0]
    # PyTorch gate order [i f g o] -> kernel column order [i f o g].
    perm = jnp.concatenate([
        jnp.arange(0 * H, 1 * H), jnp.arange(1 * H, 2 * H),
        jnp.arange(3 * H, 4 * H), jnp.arange(2 * H, 3 * H)])
    w_ih_t = params["w_ih"].T[:, perm].astype(jnp.bfloat16)        # (I, 4H)
    w_hh_t = params["w_hh"].T[:, perm].astype(jnp.bfloat16)        # (H, 4H)
    bias = (params["b_ih"] + params["b_hh"])[perm].reshape(1, 4 * H)
    bias = bias.astype(jnp.float32)
    c_pad = _round_up(max(num_classes, LANE), LANE)                # lane-dense
    fc_w_t = jnp.zeros((H, c_pad), jnp.float32).at[:, :num_classes].set(
        params["fc_w"].T).astype(jnp.bfloat16)
    fc_b = jnp.zeros((1, c_pad), jnp.float32).at[0, :num_classes].set(
        params["fc_b"])
    return {
        "w_ih_t": w_ih_t, "w_hh_t": w_hh_t, "bias": bias,
        "fc_w_t": fc_w_t, "fc_b": fc_b,
        "hidden": int(H), "num_classes": int(num_classes), "c_pad": int(c_pad),
    }


def _default_num_batch_blocks(batch):
    # v7x has 2 TensorCores: give each core an independent half-batch
    # recurrence.  On single-TC chips (v5e/v6e) the grid is a serial loop, so
    # a single big batch block minimizes the number of serial recurrences.
    try:
        kind = jax.devices()[0].device_kind.lower()
    except Exception:
        kind = ""
    if "v7" in kind and batch >= 2 * SUBLANE:
        return 2
    return 1


# ------------------------------ wrapper --------------------------------------
def swing_classifier_forward(x, packed, num_batch_blocks=None):
    """x: (B, S, 17, 3) float32. Returns (B, num_classes) float32 logits."""
    B, S, J, C = x.shape
    I = J * C
    H = packed["hidden"]
    num_classes = packed["num_classes"]
    c_pad = packed["c_pad"]

    # ---- batch blocking: as few (serial) blocks as possible; 2 on v7x -------
    if num_batch_blocks is None:
        num_batch_blocks = _default_num_batch_blocks(B)
    n_b = max(num_batch_blocks, -(-B // BB_MAX))
    bb = _round_up(-(-B // n_b), SUBLANE)
    b_pad = n_b * bb

    # ---- time chunking -------------------------------------------------------
    t_chunk = min(S, T_CHUNK_MAX)
    s_pad = _round_up(S, t_chunk)
    n_t = s_pad // t_chunk
    mask_last_chunk = (s_pad != S)
    inner_unroll = t_chunk if t_chunk <= 8 else 2

    # ---- repack x: (B,S,17,3) -> (n_b, n_t, t_chunk*bb, I), bf16 -------------
    # Rows within a chunk are ordered (t, b); padded rows/steps are masked or
    # sliced away.  bf16 halves the only streamed operand's DMA bytes.
    x_flat = x.reshape(B, S, I)
    x_p = jnp.pad(x_flat, ((0, b_pad - B), (0, s_pad - S), (0, 0)))
    x_blk = x_p.reshape(n_b, bb, n_t, t_chunk, I).transpose(0, 2, 3, 1, 4)
    x_blk = x_blk.reshape(n_b, n_t, t_chunk * bb, I).astype(jnp.bfloat16)

    kernel = _make_kernel(S, t_chunk, mask_last_chunk, inner_unroll)

    out = pl.pallas_call(
        kernel,
        out_shape=jax.ShapeDtypeStruct((b_pad, c_pad), jnp.float32),
        grid=(n_b, n_t),
        in_specs=[
            pl.BlockSpec((None, None, t_chunk * bb, I),
                         lambda b, t: (b, t, 0, 0)),                 # x chunk
            pl.BlockSpec((I, 4 * H), lambda b, t: (0, 0)),           # W_ih^T
            pl.BlockSpec((H, 4 * H), lambda b, t: (0, 0)),           # W_hh^T
            pl.BlockSpec((1, 4 * H), lambda b, t: (0, 0)),           # bias
            pl.BlockSpec((H, c_pad), lambda b, t: (0, 0)),           # fc_w^T
            pl.BlockSpec((1, c_pad), lambda b, t: (0, 0)),           # fc_b
        ],
        out_specs=pl.BlockSpec((bb, c_pad), lambda b, t: (b, 0)),
        scratch_shapes=[
            pltpu.VMEM((t_chunk * bb, 4 * H), jnp.float32),   # hoisted gx
            pltpu.VMEM((bb, H), jnp.float32),                 # h carry
            pltpu.VMEM((bb, H), jnp.float32),                 # c carry
        ],
        compiler_params=pltpu.CompilerParams(
            dimension_semantics=("parallel", "arbitrary"),
            vmem_limit_bytes=32 * 1024 * 1024),
    )(x_blk, packed["w_ih_t"], packed["w_hh_t"], packed["bias"],
      packed["fc_w_t"], packed["fc_b"])

    return out[:B, :num_classes]


# -------------------------- pure-JAX reference -------------------------------
def swing_classifier_ref(x, params):
    B, S, J, C = x.shape
    x_flat = x.reshape(B, S, J * C)
    H = params["w_hh"].shape[1]

    def step(carry, x_t):
        h, c = carry
        gates = x_t @ params["w_ih"].T + h @ params["w_hh"].T \
            + params["b_ih"] + params["b_hh"]
        i_g = jax.nn.sigmoid(gates[:, 0 * H:1 * H])
        f_g = jax.nn.sigmoid(gates[:, 1 * H:2 * H])
        g_g = jnp.tanh(gates[:, 2 * H:3 * H])
        o_g = jax.nn.sigmoid(gates[:, 3 * H:4 * H])
        c_new = f_g * c + i_g * g_g
        h_new = o_g * jnp.tanh(c_new)
        return (h_new, c_new), None

    h0 = jnp.zeros((B, H), jnp.float32)
    c0 = jnp.zeros((B, H), jnp.float32)
    (h_final, _), _ = jax.lax.scan(step, (h0, c0),
                                   jnp.transpose(x_flat, (1, 0, 2)))
    return h_final @ params["fc_w"].T + params["fc_b"]


# ------------------------------ param init -----------------------------------
def init_params(key, input_size, hidden_size, num_classes):
    # PyTorch nn.LSTM / nn.Linear default: U(-1/sqrt(H), 1/sqrt(H)).
    ks = jax.random.split(key, 6)
    bound = 1.0 / jnp.sqrt(hidden_size)
    u = lambda k, shape, b: jax.random.uniform(
        k, shape, jnp.float32, minval=-b, maxval=b)
    return {
        "w_ih": u(ks[0], (4 * hidden_size, input_size), bound),
        "w_hh": u(ks[1], (4 * hidden_size, hidden_size), bound),
        "b_ih": u(ks[2], (4 * hidden_size,), bound),
        "b_hh": u(ks[3], (4 * hidden_size,), bound),
        "fc_w": u(ks[4], (num_classes, hidden_size), bound),
        "fc_b": u(ks[5], (num_classes,), bound),
    }


# --------------------------------- main ---------------------------------------
if __name__ == "__main__":
    key = jax.random.PRNGKey(0)
    k_x, k_p = jax.random.split(key)

    batch, seq = 2, 8
    x = jax.random.normal(k_x, (batch, seq, NUM_JOINTS, NUM_COORDS), jnp.float32)
    params = init_params(k_p, INPUT_SIZE, HIDDEN_SIZE, NUM_CLASSES)
    packed = prepare_params(params)   # one-time weight packing (hoisted)

    out = jax.block_until_ready(swing_classifier_forward(x, packed))
    ref = jax.block_until_ready(swing_classifier_ref(x, params))

    assert out.shape == (batch, NUM_CLASSES)
    # bf16 MXU operands (f32 accumulation) -> tolerance relaxed vs. pure-f32.
    assert jnp.allclose(out, ref, atol=5e-2, rtol=5e-2), (
        f"max err {jnp.max(jnp.abs(out - ref))}")

    print("KERNEL_OK")
</pallas_src>

<mosaic_0001>
module attributes {stable_mosaic.version = 11 : i64} {
  func.func @kernel(%arg0: i32, %arg1: i32, %arg2: memref<1x1x64x51xbf16, #tpu.memory_space<vmem>>, %arg3: memref<51x256xbf16, #tpu.memory_space<vmem>>, %arg4: memref<64x256xbf16, #tpu.memory_space<vmem>>, %arg5: memref<1x256xf32, #tpu.memory_space<vmem>>, %arg6: memref<64x128xbf16, #tpu.memory_space<vmem>>, %arg7: memref<1x128xf32, #tpu.memory_space<vmem>>, %arg8: memref<8x128xf32, #tpu.memory_space<vmem>>, %arg9: memref<64x256xf32, #tpu.memory_space<vmem>>, %arg10: memref<8x64xf32, #tpu.memory_space<vmem>>, %arg11: memref<8x64xf32, #tpu.memory_space<vmem>>) attributes {dimension_semantics = [#tpu.dimension_semantics<parallel>, #tpu.dimension_semantics<arbitrary>], iteration_bounds = array<i64: 1, 1>, scalar_prefetch = 0 : i64, scratch_operands = 3 : i64, tpu.core_type = #tpu.core_type<tc>, window_params = [{transform_indices = @transform_0, window_bounds = array<i64: 1, 1, 64, 51>}, {pipeline_mode = #tpu.pipeline_mode<synchronous>, transform_indices = @transform_1, window_bounds = array<i64: 51, 256>}, {pipeline_mode = #tpu.pipeline_mode<synchronous>, transform_indices = @transform_2, window_bounds = array<i64: 64, 256>}, {pipeline_mode = #tpu.pipeline_mode<synchronous>, transform_indices = @transform_3, window_bounds = array<i64: 1, 256>}, {pipeline_mode = #tpu.pipeline_mode<synchronous>, transform_indices = @transform_4, window_bounds = array<i64: 64, 128>}, {pipeline_mode = #tpu.pipeline_mode<synchronous>, transform_indices = @transform_5, window_bounds = array<i64: 1, 128>}, {transform_indices = @transform_6, window_bounds = array<i64: 8, 128>}]} {
    %c0_i32 = arith.constant 0 : i32
    %0 = arith.cmpi eq, %arg1, %c0_i32 : i32
    %1 = arith.extui %0 : i1 to i32
    %c0_i32_0 = arith.constant 0 : i32
    %2 = arith.cmpi ne, %1, %c0_i32_0 : i32
    scf.if %2 {
      %cst_55 = arith.constant 0.000000e+00 : f32
      %203 = vector.broadcast %cst_55 : f32 to vector<8x64xf32>
      %c0_56 = arith.constant 0 : index
      %c0_57 = arith.constant 0 : index
      %204 = vector.load %arg10[%c0_56, %c0_57] : memref<8x64xf32, #tpu.memory_space<vmem>>, vector<8x64xf32>
      tpu.vector_store %arg10[%c0_56, %c0_57], %203 {strides = array<i32>} : memref<8x64xf32, #tpu.memory_space<vmem>>, vector<8x64xf32>,
      %cst_58 = arith.constant 0.000000e+00 : f32
      %205 = vector.broadcast %cst_58 : f32 to vector<8x64xf32>
      %c0_59 = arith.constant 0 : index
      %c0_60 = arith.constant 0 : index
      %206 = vector.load %arg11[%c0_59, %c0_60] : memref<8x64xf32, #tpu.memory_space<vmem>>, vector<8x64xf32>
      tpu.vector_store %arg11[%c0_59, %c0_60], %205 {strides = array<i32>} : memref<8x64xf32, #tpu.memory_space<vmem>>, vector<8x64xf32>,
    } else {
    }
    %c0 = arith.constant 0 : index
    %c0_1 = arith.constant 0 : index
    %c0_2 = arith.constant 0 : index
    %c0_3 = arith.constant 0 : index
    %3 = vector.load %arg2[%c0, %c0_1, %c0_2, %c0_3] : memref<1x1x64x51xbf16, #tpu.memory_space<vmem>>, vector<1x1x64x51xbf16>
    %4 = vector.shape_cast %3 : vector<1x1x64x51xbf16> to vector<64x51xbf16>
    %c0_4 = arith.constant 0 : index
    %c0_5 = arith.constant 0 : index
    %5 = vector.load %arg3[%c0_4, %c0_5] : memref<51x256xbf16, #tpu.memory_space<vmem>>, vector<51x256xbf16>
    %cst = arith.constant dense<0.000000e+00> : vector<64x256xf32>
    %6 = tpu.matmul %4, %5, %cst {dimension_numbers = #tpu.dot_dimension_numbers<[1], [0], [0], [1], [0, 0, 1, 1], [], []>} : vector<64x51xbf16>, vector<51x256xbf16>, vector<64x256xf32> -> vector<64x256xf32>
    %c0_6 = arith.constant 0 : index
    %c0_7 = arith.constant 0 : index
    %7 = vector.load %arg5[%c0_6, %c0_7] : memref<1x256xf32, #tpu.memory_space<vmem>>, vector<1x256xf32>
    %8 = vector.broadcast %7 : vector<1x256xf32> to vector<64x256xf32>
    %9 = arith.addf %6, %8 : vector<64x256xf32>
    %c0_8 = arith.constant 0 : index
    %c0_9 = arith.constant 0 : index
    %10 = vector.load %arg9[%c0_8, %c0_9] : memref<64x256xf32, #tpu.memory_space<vmem>>, vector<64x256xf32>
    tpu.vector_store %arg9[%c0_8, %c0_9], %9 {strides = array<i32>} : memref<64x256xf32, #tpu.memory_space<vmem>>, vector<64x256xf32>,
    %c0_10 = arith.constant 0 : index
    %c0_11 = arith.constant 0 : index
    %11 = vector.load %arg4[%c0_10, %c0_11] : memref<64x256xbf16, #tpu.memory_space<vmem>>, vector<64x256xbf16>
    %c0_12 = arith.constant 0 : index
    %c0_13 = arith.constant 0 : index
    %12 = vector.load %arg10[%c0_12, %c0_13] : memref<8x64xf32, #tpu.memory_space<vmem>>, vector<8x64xf32>
    %c0_14 = arith.constant 0 : index
    %c0_15 = arith.constant 0 : index
    %13 = vector.load %arg11[%c0_14, %c0_15] : memref<8x64xf32, #tpu.memory_space<vmem>>, vector<8x64xf32>
    %c0_i32_16 = arith.constant 0 : i32
    %c8_i32 = arith.constant 8 : i32
    %14 = arith.muli %c0_i32_16, %c8_i32 : i32
    %15 = tpu.assume_multiple %14, 8 : i32
    %16 = arith.index_cast %15 : i32 to index
    %c0_17 = arith.constant 0 : index
    %17 = vector.load %arg9[%16, %c0_17] : memref<64x256xf32, #tpu.memory_space<vmem>>, vector<8x256xf32>
    %18 = arith.truncf %12 : vector<8x64xf32> to vector<8x64xbf16>
    %cst_18 = arith.constant dense<0.000000e+00> : vector<8x256xf32>
    %19 = tpu.matmul %18, %11, %cst_18 {dimension_numbers = #tpu.dot_dimension_numbers<[1], [0], [0], [1], [0, 0, 1, 1], [], []>} : vector<8x64xbf16>, vector<64x256xbf16>, vector<8x256xf32> -> vector<8x256xf32>
    %20 = arith.addf %17, %19 : vector<8x256xf32>
    %21 = vector.extract_strided_slice %20 {offsets = [0, 0], sizes = [8, 192], strides = [1, 1]} : vector<8x256xf32> to vector<8x192xf32>
    %22 = arith.negf %21 : vector<8x192xf32>
    %23 = math.exp %22 : vector<8x192xf32>
    %cst_19 = arith.constant 1.000000e+00 : f32
    %24 = vector.broadcast %cst_19 : f32 to vector<8x192xf32>
    %25 = arith.addf %24, %23 : vector<8x192xf32>
    %26 = arith.divf %24, %25 : vector<8x192xf32>
    %27 = vector.extract_strided_slice %20 {offsets = [0, 192], sizes = [8, 64], strides = [1, 1]} : vector<8x256xf32> to vector<8x64xf32>
    %28 = math.tanh %27 : vector<8x64xf32>
    %29 = vector.extract_strided_slice %26 {offsets = [0, 0], sizes = [8, 64], strides = [1, 1]} : vector<8x192xf32> to vector<8x64xf32>
    %30 = vector.extract_strided_slice %26 {offsets = [0, 64], sizes = [8, 64], strides = [1, 1]} : vector<8x192xf32> to vector<8x64xf32>
    %31 = vector.extract_strided_slice %26 {offsets = [0, 128], sizes = [8, 64], strides = [1, 1]} : vector<8x192xf32> to vector<8x64xf32>
    %32 = arith.mulf %30, %13 : vector<8x64xf32>
    %33 = arith.mulf %29, %28 : vector<8x64xf32>
    %34 = arith.addf %32, %33 : vector<8x64xf32>
    %35 = math.tanh %34 : vector<8x64xf32>
    %36 = arith.mulf %31, %35 : vector<8x64xf32>
    %c1_i32 = arith.constant 1 : i32
    %c8_i32_20 = arith.constant 8 : i32
    %37 = arith.muli %c1_i32, %c8_i32_20 : i32
    %38 = tpu.assume_multiple %37, 8 : i32
    %39 = arith.index_cast %38 : i32 to index
    %c0_21 = arith.constant 0 : index
    %40 = vector.load %arg9[%39, %c0_21] : memref<64x256xf32, #tpu.memory_space<vmem>>, vector<8x256xf32>
    %41 = arith.truncf %36 : vector<8x64xf32> to vector<8x64xbf16>
    %cst_22 = arith.constant dense<0.000000e+00> : vector<8x256xf32>
    %42 = tpu.matmul %41, %11, %cst_22 {dimension_numbers = #tpu.dot_dimension_numbers<[1], [0], [0], [1], [0, 0, 1, 1], [], []>} : vector<8x64xbf16>, vector<64x256xbf16>, vector<8x256xf32> -> vector<8x256xf32>
    %43 = arith.addf %40, %42 : vector<8x256xf32>
    %44 = vector.extract_strided_slice %43 {offsets = [0, 0], sizes = [8, 192], strides = [1, 1]} : vector<8x256xf32> to vector<8x192xf32>
    %45 = arith.negf %44 : vector<8x192xf32>
    %46 = math.exp %45 : vector<8x192xf32>
    %cst_23 = arith.constant 1.000000e+00 : f32
    %47 = vector.broadcast %cst_23 : f32 to vector<8x192xf32>
    %48 = arith.addf %47, %46 : vector<8x192xf32>
    %49 = arith.divf %47, %48 : vector<8x192xf32>
    %50 = vector.extract_strided_slice %43 {offsets = [0, 192], sizes = [8, 64], strides = [1, 1]} : vector<8x256xf32> to vector<8x64xf32>
    %51 = math.tanh %50 : vector<8x64xf32>
    %52 = vector.extract_strided_slice %49 {offsets = [0, 0], sizes = [8, 64], strides = [1, 1]} : vector<8x192xf32> to vector<8x64xf32>
    %53 = vector.extract_strided_slice %49 {offsets = [0, 64], sizes = [8, 64], strides = [1, 1]} : vector<8x192xf32> to vector<8x64xf32>
    %54 = vector.extract_strided_slice %49 {offsets = [0, 128], sizes = [8, 64], strides = [1, 1]} : vector<8x192xf32> to vector<8x64xf32>
    %55 = arith.mulf %53, %34 : vector<8x64xf32>
    %56 = arith.mulf %52, %51 : vector<8x64xf32>
    %57 = arith.addf %55, %56 : vector<8x64xf32>
    %58 = math.tanh %57 : vector<8x64xf32>
    %59 = arith.mulf %54, %58 : vector<8x64xf32>
    %c2_i32 = arith.constant 2 : i32
    %c8_i32_24 = arith.constant 8 : i32
    %60 = arith.muli %c2_i32, %c8_i32_24 : i32
    %61 = tpu.assume_multiple %60, 8 : i32
    %62 = arith.index_cast %61 : i32 to index
    %c0_25 = arith.constant 0 : index
    %63 = vector.load %arg9[%62, %c0_25] : memref<64x256xf32, #tpu.memory_space<vmem>>, vector<8x256xf32>
    %64 = arith.truncf %59 : vector<8x64xf32> to vector<8x64xbf16>
    %cst_26 = arith.constant dense<0.000000e+00> : vector<8x256xf32>
    %65 = tpu.matmul %64, %11, %cst_26 {dimension_numbers = #tpu.dot_dimension_numbers<[1], [0], [0], [1], [0, 0, 1, 1], [], []>} : vector<8x64xbf16>, vector<64x256xbf16>, vector<8x256xf32> -> vector<8x256xf32>
    %66 = arith.addf %63, %65 : vector<8x256xf32>
    %67 = vector.extract_strided_slice %66 {offsets = [0, 0], sizes = [8, 192], strides = [1, 1]} : vector<8x256xf32> to vector<8x192xf32>
    %68 = arith.negf %67 : vector<8x192xf32>
    %69 = math.exp %68 : vector<8x192xf32>
    %cst_27 = arith.constant 1.000000e+00 : f32
    %70 = vector.broadcast %cst_27 : f32 to vector<8x192xf32>
    %71 = arith.addf %70, %69 : vector<8x192xf32>
    %72 = arith.divf %70, %71 : vector<8x192xf32>
    %73 = vector.extract_strided_slice %66 {offsets = [0, 192], sizes = [8, 64], strides = [1, 1]} : vector<8x256xf32> to vector<8x64xf32>
    %74 = math.tanh %73 : vector<8x64xf32>
    %75 = vector.extract_strided_slice %72 {offsets = [0, 0], sizes = [8, 64], strides = [1, 1]} : vector<8x192xf32> to vector<8x64xf32>
    %76 = vector.extract_strided_slice %72 {offsets = [0, 64], sizes = [8, 64], strides = [1, 1]} : vector<8x192xf32> to vector<8x64xf32>
    %77 = vector.extract_strided_slice %72 {offsets = [0, 128], sizes = [8, 64], strides = [1, 1]} : vector<8x192xf32> to vector<8x64xf32>
    %78 = arith.mulf %76, %57 : vector<8x64xf32>
    %79 = arith.mulf %75, %74 : vector<8x64xf32>
    %80 = arith.addf %78, %79 : vector<8x64xf32>
    %81 = math.tanh %80 : vector<8x64xf32>
    %82 = arith.mulf %77, %81 : vector<8x64xf32>
    %c3_i32 = arith.constant 3 : i32
    %c8_i32_28 = arith.constant 8 : i32
    %83 = arith.muli %c3_i32, %c8_i32_28 : i32
    %84 = tpu.assume_multiple %83, 8 : i32
    %85 = arith.index_cast %84 : i32 to index
    %c0_29 = arith.constant 0 : index
    %86 = vector.load %arg9[%85, %c0_29] : memref<64x256xf32, #tpu.memory_space<vmem>>, vector<8x256xf32>
    %87 = arith.truncf %82 : vector<8x64xf32> to vector<8x64xbf16>
    %cst_30 = arith.constant dense<0.000000e+00> : vector<8x256xf32>
    %88 = tpu.matmul %87, %11, %cst_30 {dimension_numbers = #tpu.dot_dimension_numbers<[1], [0], [0], [1], [0, 0, 1, 1], [], []>} : vector<8x64xbf16>, vector<64x256xbf16>, vector<8x256xf32> -> vector<8x256xf32>
    %89 = arith.addf %86, %88 : vector<8x256xf32>
    %90 = vector.extract_strided_slice %89 {offsets = [0, 0], sizes = [8, 192], strides = [1, 1]} : vector<8x256xf32> to vector<8x192xf32>
    %91 = arith.negf %90 : vector<8x192xf32>
    %92 = math.exp %91 : vector<8x192xf32>
    %cst_31 = arith.constant 1.000000e+00 : f32
    %93 = vector.broadcast %cst_31 : f32 to vector<8x192xf32>
    %94 = arith.addf %93, %92 : vector<8x192xf32>
    %95 = arith.divf %93, %94 : vector<8x192xf32>
    %96 = vector.extract_strided_slice %89 {offsets = [0, 192], sizes = [8, 64], strides = [1, 1]} : vector<8x256xf32> to vector<8x64xf32>
    %97 = math.tanh %96 : vector<8x64xf32>
    %98 = vector.extract_strided_slice %95 {offsets = [0, 0], sizes = [8, 64], strides = [1, 1]} : vector<8x192xf32> to vector<8x64xf32>
    %99 = vector.extract_strided_slice %95 {offsets = [0, 64], sizes = [8, 64], strides = [1, 1]} : vector<8x192xf32> to vector<8x64xf32>
    %100 = vector.extract_strided_slice %95 {offsets = [0, 128], sizes = [8, 64], strides = [1, 1]} : vector<8x192xf32> to vector<8x64xf32>
    %101 = arith.mulf %99, %80 : vector<8x64xf32>
    %102 = arith.mulf %98, %97 : vector<8x64xf32>
    %103 = arith.addf %101, %102 : vector<8x64xf32>
    %104 = math.tanh %103 : vector<8x64xf32>
    %105 = arith.mulf %100, %104 : vector<8x64xf32>
    %c4_i32 = arith.constant 4 : i32
    %c8_i32_32 = arith.constant 8 : i32
    %106 = arith.muli %c4_i32, %c8_i32_32 : i32
    %107 = tpu.assume_multiple %106, 8 : i32
    %108 = arith.index_cast %107 : i32 to index
    %c0_33 = arith.constant 0 : index
    %109 = vector.load %arg9[%108, %c0_33] : memref<64x256xf32, #tpu.memory_space<vmem>>, vector<8x256xf32>
    %110 = arith.truncf %105 : vector<8x64xf32> to vector<8x64xbf16>
    %cst_34 = arith.constant dense<0.000000e+00> : vector<8x256xf32>
    %111 = tpu.matmul %110, %11, %cst_34 {dimension_numbers = #tpu.dot_dimension_numbers<[1], [0], [0], [1], [0, 0, 1, 1], [], []>} : vector<8x64xbf16>, vector<64x256xbf16>, vector<8x256xf32> -> vector<8x256xf32>
    %112 = arith.addf %109, %111 : vector<8x256xf32>
    %113 = vector.extract_strided_slice %112 {offsets = [0, 0], sizes = [8, 192], strides = [1, 1]} : vector<8x256xf32> to vector<8x192xf32>
    %114 = arith.negf %113 : vector<8x192xf32>
    %115 = math.exp %114 : vector<8x192xf32>
    %cst_35 = arith.constant 1.000000e+00 : f32
    %116 = vector.broadcast %cst_35 : f32 to vector<8x192xf32>
    %117 = arith.addf %116, %115 : vector<8x192xf32>
    %118 = arith.divf %116, %117 : vector<8x192xf32>
    %119 = vector.extract_strided_slice %112 {offsets = [0, 192], sizes = [8, 64], strides = [1, 1]} : vector<8x256xf32> to vector<8x64xf32>
    %120 = math.tanh %119 : vector<8x64xf32>
    %121 = vector.extract_strided_slice %118 {offsets = [0, 0], sizes = [8, 64], strides = [1, 1]} : vector<8x192xf32> to vector<8x64xf32>
    %122 = vector.extract_strided_slice %118 {offsets = [0, 64], sizes = [8, 64], strides = [1, 1]} : vector<8x192xf32> to vector<8x64xf32>
    %123 = vector.extract_strided_slice %118 {offsets = [0, 128], sizes = [8, 64], strides = [1, 1]} : vector<8x192xf32> to vector<8x64xf32>
    %124 = arith.mulf %122, %103 : vector<8x64xf32>
    %125 = arith.mulf %121, %120 : vector<8x64xf32>
    %126 = arith.addf %124, %125 : vector<8x64xf32>
    %127 = math.tanh %126 : vector<8x64xf32>
    %128 = arith.mulf %123, %127 : vector<8x64xf32>
    %c5_i32 = arith.constant 5 : i32
    %c8_i32_36 = arith.constant 8 : i32
    %129 = arith.muli %c5_i32, %c8_i32_36 : i32
    %130 = tpu.assume_multiple %129, 8 : i32
    %131 = arith.index_cast %130 : i32 to index
    %c0_37 = arith.constant 0 : index
    %132 = vector.load %arg9[%131, %c0_37] : memref<64x256xf32, #tpu.memory_space<vmem>>, vector<8x256xf32>
    %133 = arith.truncf %128 : vector<8x64xf32> to vector<8x64xbf16>
    %cst_38 = arith.constant dense<0.000000e+00> : vector<8x256xf32>
    %134 = tpu.matmul %133, %11, %cst_38 {dimension_numbers = #tpu.dot_dimension_numbers<[1], [0], [0], [1], [0, 0, 1, 1], [], []>} : vector<8x64xbf16>, vector<64x256xbf16>, vector<8x256xf32> -> vector<8x256xf32>
    %135 = arith.addf %132, %134 : vector<8x256xf32>
    %136 = vector.extract_strided_slice %135 {offsets = [0, 0], sizes = [8, 192], strides = [1, 1]} : vector<8x256xf32> to vector<8x192xf32>
    %137 = arith.negf %136 : vector<8x192xf32>
    %138 = math.exp %137 : vector<8x192xf32>
    %cst_39 = arith.constant 1.000000e+00 : f32
    %139 = vector.broadcast %cst_39 : f32 to vector<8x192xf32>
    %140 = arith.addf %139, %138 : vector<8x192xf32>
    %141 = arith.divf %139, %140 : vector<8x192xf32>
    %142 = vector.extract_strided_slice %135 {offsets = [0, 192], sizes = [8, 64], strides = [1, 1]} : vector<8x256xf32> to vector<8x64xf32>
    %143 = math.tanh %142 : vector<8x64xf32>
    %144 = vector.extract_strided_slice %141 {offsets = [0, 0], sizes = [8, 64], strides = [1, 1]} : vector<8x192xf32> to vector<8x64xf32>
    %145 = vector.extract_strided_slice %141 {offsets = [0, 64], sizes = [8, 64], strides = [1, 1]} : vector<8x192xf32> to vector<8x64xf32>
    %146 = vector.extract_strided_slice %141 {offsets = [0, 128], sizes = [8, 64], strides = [1, 1]} : vector<8x192xf32> to vector<8x64xf32>
    %147 = arith.mulf %145, %126 : vector<8x64xf32>
    %148 = arith.mulf %144, %143 : vector<8x64xf32>
    %149 = arith.addf %147, %148 : vector<8x64xf32>
    %150 = math.tanh %149 : vector<8x64xf32>
    %151 = arith.mulf %146, %150 : vector<8x64xf32>
    %c6_i32 = arith.constant 6 : i32
    %c8_i32_40 = arith.constant 8 : i32
    %152 = arith.muli %c6_i32, %c8_i32_40 : i32
    %153 = tpu.assume_multiple %152, 8 : i32
    %154 = arith.index_cast %153 : i32 to index
    %c0_41 = arith.constant 0 : index
    %155 = vector.load %arg9[%154, %c0_41] : memref<64x256xf32, #tpu.memory_space<vmem>>, vector<8x256xf32>
    %156 = arith.truncf %151 : vector<8x64xf32> to vector<8x64xbf16>
    %cst_42 = arith.constant dense<0.000000e+00> : vector<8x256xf32>
    %157 = tpu.matmul %156, %11, %cst_42 {dimension_numbers = #tpu.dot_dimension_numbers<[1], [0], [0], [1], [0, 0, 1, 1], [], []>} : vector<8x64xbf16>, vector<64x256xbf16>, vector<8x256xf32> -> vector<8x256xf32>
    %158 = arith.addf %155, %157 : vector<8x256xf32>
    %159 = vector.extract_strided_slice %158 {offsets = [0, 0], sizes = [8, 192], strides = [1, 1]} : vector<8x256xf32> to vector<8x192xf32>
    %160 = arith.negf %159 : vector<8x192xf32>
    %161 = math.exp %160 : vector<8x192xf32>
    %cst_43 = arith.constant 1.000000e+00 : f32
    %162 = vector.broadcast %cst_43 : f32 to vector<8x192xf32>
    %163 = arith.addf %162, %161 : vector<8x192xf32>
    %164 = arith.divf %162, %163 : vector<8x192xf32>
    %165 = vector.extract_strided_slice %158 {offsets = [0, 192], sizes = [8, 64], strides = [1, 1]} : vector<8x256xf32> to vector<8x64xf32>
    %166 = math.tanh %165 : vector<8x64xf32>
    %167 = vector.extract_strided_slice %164 {offsets = [0, 0], sizes = [8, 64], strides = [1, 1]} : vector<8x192xf32> to vector<8x64xf32>
    %168 = vector.extract_strided_slice %164 {offsets = [0, 64], sizes = [8, 64], strides = [1, 1]} : vector<8x192xf32> to vector<8x64xf32>
    %169 = vector.extract_strided_slice %164 {offsets = [0, 128], sizes = [8, 64], strides = [1, 1]} : vector<8x192xf32> to vector<8x64xf32>
    %170 = arith.mulf %168, %149 : vector<8x64xf32>
    %171 = arith.mulf %167, %166 : vector<8x64xf32>
    %172 = arith.addf %170, %171 : vector<8x64xf32>
    %173 = math.tanh %172 : vector<8x64xf32>
    %174 = arith.mulf %169, %173 : vector<8x64xf32>
    %c7_i32 = arith.constant 7 : i32
    %c8_i32_44 = arith.constant 8 : i32
    %175 = arith.muli %c7_i32, %c8_i32_44 : i32
    %176 = tpu.assume_multiple %175, 8 : i32
    %177 = arith.index_cast %176 : i32 to index
    %c0_45 = arith.constant 0 : index
    %178 = vector.load %arg9[%177, %c0_45] : memref<64x256xf32, #tpu.memory_space<vmem>>, vector<8x256xf32>
    %179 = arith.truncf %174 : vector<8x64xf32> to vector<8x64xbf16>
    %cst_46 = arith.constant dense<0.000000e+00> : vector<8x256xf32>
    %180 = tpu.matmul %179, %11, %cst_46 {dimension_numbers = #tpu.dot_dimension_numbers<[1], [0], [0], [1], [0, 0, 1, 1], [], []>} : vector<8x64xbf16>, vector<64x256xbf16>, vector<8x256xf32> -> vector<8x256xf32>
    %181 = arith.addf %178, %180 : vector<8x256xf32>
    %182 = vector.extract_strided_slice %181 {offsets = [0, 0], sizes = [8, 192], strides = [1, 1]} : vector<8x256xf32> to vector<8x192xf32>
    %183 = arith.negf %182 : vector<8x192xf32>
    %184 = math.exp %183 : vector<8x192xf32>
    %cst_47 = arith.constant 1.000000e+00 : f32
    %185 = vector.broadcast %cst_47 : f32 to vector<8x192xf32>
    %186 = arith.addf %185, %184 : vector<8x192xf32>
    %187 = arith.divf %185, %186 : vector<8x192xf32>
    %188 = vector.extract_strided_slice %181 {offsets = [0, 192], sizes = [8, 64], strides = [1, 1]} : vector<8x256xf32> to vector<8x64xf32>
    %189 = math.tanh %188 : vector<8x64xf32>
    %190 = vector.extract_strided_slice %187 {offsets = [0, 0], sizes = [8, 64], strides = [1, 1]} : vector<8x192xf32> to vector<8x64xf32>
    %191 = vector.extract_strided_slice %187 {offsets = [0, 64], sizes = [8, 64], strides = [1, 1]} : vector<8x192xf32> to vector<8x64xf32>
    %192 = vector.extract_strided_slice %187 {offsets = [0, 128], sizes = [8, 64], strides = [1, 1]} : vector<8x192xf32> to vector<8x64xf32>
    %193 = arith.mulf %191, %172 : vector<8x64xf32>
    %194 = arith.mulf %190, %189 : vector<8x64xf32>
    %195 = arith.addf %193, %194 : vector<8x64xf32>
    %196 = math.tanh %195 : vector<8x64xf32>
    %197 = arith.mulf %192, %196 : vector<8x64xf32>
    %c8_i32_48 = arith.constant 8 : i32
    %c0_49 = arith.constant 0 : index
    %c0_50 = arith.constant 0 : index
    %198 = vector.load %arg10[%c0_49, %c0_50] : memref<8x64xf32, #tpu.memory_space<vmem>>, vector<8x64xf32>
    tpu.vector_store %arg10[%c0_49, %c0_50], %197 {strides = array<i32>} : memref<8x64xf32, #tpu.memory_space<vmem>>, vector<8x64xf32>,
    %c0_51 = arith.constant 0 : index
    %c0_52 = arith.constant 0 : index
    %199 = vector.load %arg11[%c0_51, %c0_52] : memref<8x64xf32, #tpu.memory_space<vmem>>, vector<8x64xf32>
    tpu.vector_store %arg11[%c0_51, %c0_52], %195 {strides = array<i32>} : memref<8x64xf32, #tpu.memory_space<vmem>>, vector<8x64xf32>,
    %c0_i32_53 = arith.constant 0 : i32
    %200 = arith.cmpi eq, %arg1, %c0_i32_53 : i32
    %201 = arith.extui %200 : i1 to i32
    %c0_i32_54 = arith.constant 0 : i32
    %202 = arith.cmpi ne, %201, %c0_i32_54 : i32
    scf.if %202 {
      %203 = arith.truncf %197 : vector<8x64xf32> to vector<8x64xbf16>
      %c0_55 = arith.constant 0 : index
      %c0_56 = arith.constant 0 : index
      %204 = vector.load %arg6[%c0_55, %c0_56] : memref<64x128xbf16, #tpu.memory_space<vmem>>, vector<64x128xbf16>
      %cst_57 = arith.constant dense<0.000000e+00> : vector<8x128xf32>
      %205 = tpu.matmul %203, %204, %cst_57 {dimension_numbers = #tpu.dot_dimension_numbers<[1], [0], [0], [1], [0, 0, 1, 1], [], []>} : vector<8x64xbf16>, vector<64x128xbf16>, vector<8x128xf32> -> vector<8x128xf32>
      %c0_58 = arith.constant 0 : index
      %c0_59 = arith.constant 0 : index
      %206 = vector.load %arg7[%c0_58, %c0_59] : memref<1x128xf32, #tpu.memory_space<vmem>>, vector<1x128xf32>
      %207 = vector.broadcast %206 : vector<1x128xf32> to vector<8x128xf32>
      %208 = arith.addf %205, %207 : vector<8x128xf32>
      %c0_60 = arith.constant 0 : index
      %c0_61 = arith.constant 0 : index
      %209 = vector.load %arg8[%c0_60, %c0_61] : memref<8x128xf32, #tpu.memory_space<vmem>>, vector<8x128xf32>
      tpu.vector_store %arg8[%c0_60, %c0_61], %208 {strides = array<i32>} : memref<8x128xf32, #tpu.memory_space<vmem>>, vector<8x128xf32>,
    } else {
    }
    return
  }
  func.func @transform_0(%arg0: i32, %arg1: i32) -> (i32, i32, i32, i32) {
    %c0_i32 = arith.constant 0 : i32
    %c0_i32_0 = arith.constant 0 : i32
    %c0_i32_1 = arith.constant 0 : i32
    return %arg0, %arg1, %c0_i32, %c0_i32_0 : i32, i32, i32, i32
  }
  func.func @transform_1(%arg0: i32, %arg1: i32) -> (i32, i32) {
    %c0_i32 = arith.constant 0 : i32
    %c0_i32_0 = arith.constant 0 : i32
    %c0_i32_1 = arith.constant 0 : i32
    return %c0_i32, %c0_i32_0 : i32, i32
  }
  func.func @transform_2(%arg0: i32, %arg1: i32) -> (i32, i32) {
    %c0_i32 = arith.constant 0 : i32
    %c0_i32_0 = arith.constant 0 : i32
    %c0_i32_1 = arith.constant 0 : i32
    return %c0_i32, %c0_i32_0 : i32, i32
  }
  func.func @transform_3(%arg0: i32, %arg1: i32) -> (i32, i32) {
    %c0_i32 = arith.constant 0 : i32
    %c0_i32_0 = arith.constant 0 : i32
    %c0_i32_1 = arith.constant 0 : i32
    return %c0_i32, %c0_i32_0 : i32, i32
  }
  func.func @transform_4(%arg0: i32, %arg1: i32) -> (i32, i32) {
    %c0_i32 = arith.constant 0 : i32
    %c0_i32_0 = arith.constant 0 : i32
    %c0_i32_1 = arith.constant 0 : i32
    return %c0_i32, %c0_i32_0 : i32, i32
  }
  func.func @transform_5(%arg0: i32, %arg1: i32) -> (i32, i32) {
    %c0_i32 = arith.constant 0 : i32
    %c0_i32_0 = arith.constant 0 : i32
    %c0_i32_1 = arith.constant 0 : i32
    return %c0_i32, %c0_i32_0 : i32, i32
  }
  func.func @transform_6(%arg0: i32, %arg1: i32) -> (i32, i32) {
    %c0_i32 = arith.constant 0 : i32
    %c0_i32_0 = arith.constant 0 : i32
    return %arg0, %c0_i32 : i32, i32
  }
}

</mosaic_0001>

<llo_original>
// kernel: tpu_custom_call.1
$region0: #{tpu_custom_call.1}
  #allocation0 [shape = 'u32[]', space=smem, size = 0x4, offset = 0x4, fixed_abs, tag = 'smem constant byte address 0x4 - core index']
  #allocation1 [shape = 'u32[144,128]{1,0:T(1,128)}', space=vmem, size = 0x12000, scoped, tag = 'internal scratch']
  #allocation2 [shape = 'f32[64,256]{1,0:T(8,128)}', space=vmem, size = 0x10000, scoped, tag = 'scratch operand']
  #allocation3 [shape = 'f32[8,64]{1,0:T(8,128)}', space=vmem, size = 0x1000, scoped, tag = 'scratch operand']
  #allocation4 [shape = 'f32[8,64]{1,0:T(8,128)}', space=vmem, size = 0x1000, scoped, tag = 'scratch operand']
  %s0 = inlined_call_operand.vmem [shape: bf16[1,1,64,51], index: 0, kind: input, shape index: {}]
  %s1 = inlined_call_operand.vmem [shape: bf16[51,256], index: 1, kind: input, shape index: {}]
  %s2 = inlined_call_operand.hbm [shape: bf16[64,256], index: 2, kind: input, shape index: {}]
  %s3 = inlined_call_operand.vmem [shape: f32[1,256], index: 3, kind: input, shape index: {}]
  %s4 = inlined_call_operand.hbm [shape: bf16[64,128], index: 4, kind: input, shape index: {}]
  %s5 = inlined_call_operand.vmem [shape: f32[1,128], index: 5, kind: input, shape index: {}]
  %s6 = inlined_call_operand.hbm [shape: f32[8,128], index: 6, kind: output, shape index: {}]
  %s7 = sld [smem:[#allocation0]]
  $region50: #{tpu_custom_call.1} parent=0
    _
  %s9 = ssub.s32 1, %s7
  %s10 = scalar_select 0, %s9, %s7
  $region1: #{tpu_custom_call.1} parent=0
    #allocation5 [shape = 'u8[32768]{0}', space=vmem, size = 0x8000, scoped, tag = 'input window, operand 2, single buffered']
    #allocation6 [shape = 's32[1]{0}', space=sflag, size = 0x4, scoped, tag = 'scoped memory for tpu_custom_call.1']
    #allocation7 [shape = 's32[1]{0}', space=sflag, size = 0x4, scoped, tag = 'scoped memory for tpu_custom_call.1']
    #allocation8 [shape = 'u8[16384]{0}', space=vmem, size = 0x4000, scoped, tag = 'input window, operand 4, single buffered']
    #allocation9 [shape = 's32[1]{0}', space=sflag, size = 0x4, scoped, tag = 'scoped memory for tpu_custom_call.1']
    #allocation10 [shape = 'u8[4096]{0}', space=vmem, size = 0x1000, scoped, tag = 'output window, operand 0, single buffered']
    %11 = vsyncpa [#allocation6], 0
    %12 = vsyncpa [#allocation9], 0
    %13 = vsyncpa [#allocation7], 0
    // Predicated region
    $region2: #{tpu_custom_call.1} parent=1 // pred_check
      _
    $region3: #{tpu_custom_call.1} parent=1 // pred_check_branch
      %15 = sbr.rel (0) target = $region5
    $region4: #{tpu_custom_call.1} parent=1 // pred_region
      _
    $region5: #{tpu_custom_call.1} parent=1 // pred_fallthru
      _
    // Predicated region
    $region6: #{tpu_custom_call.1} parent=1 // pred_check
      _
    $region7: #{tpu_custom_call.1} parent=1 // pred_check_branch
      %17 = sbr.rel (0) target = $region9
    $region8: #{tpu_custom_call.1} parent=1 // pred_region
      _
    $region9: #{tpu_custom_call.1} parent=1 // pred_fallthru
      _
    // Predicated region
    $region10: #{tpu_custom_call.1} parent=1 // pred_check
      _
    $region11: #{tpu_custom_call.1} parent=1 // pred_check_branch
      %19 = sbr.rel (0) target = $region13
    $region12: #{tpu_custom_call.1} parent=1 // pred_region
      %s21 = ssub.s32 1024, 1024
      %22 = vsyncadd [#allocation6], %s21
      %s23 = sshll.u32 [#allocation5], 4
      %s24 = int_to_ptr.vmem [resolvable:$true] %s23
      %29 = dma.hbm_to_vmem [thread:$0]  %s2, 1024, %s24, [#allocation6], 128, 128, 8
    $region13: #{tpu_custom_call.1} parent=1 // pred_fallthru
      _
    // Predicated region
    $region14: #{tpu_custom_call.1} parent=1 // pred_check
      _
    $region15: #{tpu_custom_call.1} parent=1 // pred_check_branch
      %31 = sbr.rel (0) target = $region17
    $region16: #{tpu_custom_call.1} parent=1 // pred_region
      _
    $region17: #{tpu_custom_call.1} parent=1 // pred_fallthru
      _
    // Predicated region
    $region18: #{tpu_custom_call.1} parent=1 // pred_check
      _
    $region19: #{tpu_custom_call.1} parent=1 // pred_check_branch
      %33 = sbr.rel (0) target = $region21
    $region20: #{tpu_custom_call.1} parent=1 // pred_region
      %s35 = ssub.s32 512, 512
      %36 = vsyncadd [#allocation9], %s35
      %s37 = sshll.u32 [#allocation8], 4
      %s38 = int_to_ptr.vmem [resolvable:$true] %s37
      %43 = dma.hbm_to_vmem [thread:$0]  %s4, 512, %s38, [#allocation9], 64, 64, 4
    $region21: #{tpu_custom_call.1} parent=1 // pred_fallthru
      _
    // Predicated region
    $region22: #{tpu_custom_call.1} parent=1 // pred_check
      _
    $region23: #{tpu_custom_call.1} parent=1 // pred_check_branch
      %45 = sbr.rel (0) target = $region25
    $region24: #{tpu_custom_call.1} parent=1 // pred_region
      _
    $region25: #{tpu_custom_call.1} parent=1 // pred_fallthru
      _
    // Predicated region
    $region26: #{tpu_custom_call.1} parent=1 // pred_check
      _
    $region27: #{tpu_custom_call.1} parent=1 // pred_check_branch
      %47 = sbr.rel (0) target = $region29
    $region28: #{tpu_custom_call.1} parent=1 // pred_region
      %48 = dma.done [#allocation6], 1024
    $region29: #{tpu_custom_call.1} parent=1 // pred_fallthru
      _
    // Predicated region
    $region30: #{tpu_custom_call.1} parent=1 // pred_check
      _
    $region31: #{tpu_custom_call.1} parent=1 // pred_check_branch
      %50 = sbr.rel (0) target = $region33
    $region32: #{tpu_custom_call.1} parent=1 // pred_region
      %51 = dma.done [#allocation9], 512
    $region33: #{tpu_custom_call.1} parent=1 // pred_fallthru
      _
    %p53 = scmp.eq.s32.totalorder 0, 0
    // Predicated region
    $region34: #{tpu_custom_call.1} parent=1 // pred_check
      %p54 = pneg %p53
    $region35: #{tpu_custom_call.1} parent=1 // pred_check_branch
      %56 = sbr.rel (%p54) target = $region37
    $region36: #{tpu_custom_call.1} parent=1 // pred_region
      %vm57 = vcmask 523264
      %58 = vst.msk [vmem:[#allocation3] sm:$0xff] %vm57, 0.0
      %59 = vst.msk [vmem:[#allocation4] sm:$0xff] %vm57, 0.0
    $region37: #{tpu_custom_call.1} parent=1 // pred_fallthru
      _
    %v60 = vld [vmem:[%s0] sm:$0xf]
    %v61 = vld [vmem:[%s0 + $0x4] sm:$0xf]
    %v62 = vld [vmem:[%s0 + $0x8] sm:$0xf]
    %v63 = vld [vmem:[%s0 + $0xc] sm:$0xf]
    %v64 = vld [vmem:[%s0 + $0x10] sm:$0xf]
    %v65 = vld [vmem:[%s0 + $0x14] sm:$0xf]
    %v66 = vld [vmem:[%s0 + $0x18] sm:$0xf]
    %v67 = vld [vmem:[%s0 + $0x1c] sm:$0xf]
    %v68 = vld [vmem:[%s1] sm:$0xff]
    %v69 = vld [vmem:[%s1 + $0x8] sm:$0xff]
    %v70 = vld [vmem:[%s1 + $0x10] sm:$0xff]
    %v71 = vld [vmem:[%s1 + $0x18] sm:$0xff]
    %v72 = vld [vmem:[%s1 + $0x20] sm:$0xff]
    %v73 = vld [vmem:[%s1 + $0x28] sm:$0xff]
    %v74 = vld [vmem:[%s1 + $0x30] sm:$0x33]
    %v75 = vld [vmem:[%s3] sm:$0x3]
    %v77 = vlaneseq
    %v78 = vshrl.u32 %v77, 7
    %v79 = vsub.s32 0, %v78
    %v80 = vrot.slane %v75, %v79
    %v81 = vlaneseq
    %v82 = vshrl.u32 %v81, 7
    %v83 = vsub.s32 1, %v82
    %v84 = vrot.slane %v75, %v83
    %v95 = vunpack.c.l.b16 %v60
    %v96 = vunpack.c.l.b16 %v61
    %v97 = vunpack.c.l.b16 %v62
    %v98 = vunpack.c.l.b16 %v63
    %v99 = vunpack.c.l.b16 %v64
    %v100 = vunpack.c.l.b16 %v65
    %v101 = vunpack.c.l.b16 %v66
    %v102 = vunpack.c.l.b16 %v67
    %v103 = vpack.c.b16 %v96, %v95
    %v104 = vpack.c.b16 %v98, %v97
    %v105 = vpack.c.b16 %v100, %v99
    %v106 = vpack.c.b16 %v102, %v101
    %v114 = vunpack.c.l.b16 %v68
    %v115 = vunpack.c.h.b16 %v68
    %v116 = vunpack.c.l.b16 %v69
    %v117 = vunpack.c.h.b16 %v69
    %v118 = vunpack.c.l.b16 %v70
    %v119 = vunpack.c.h.b16 %v70
    %v120 = vunpack.c.l.b16 %v71
    %v121 = vunpack.c.h.b16 %v71
    %v122 = vunpack.c.l.b16 %v72
    %v123 = vunpack.c.h.b16 %v72
    %v124 = vunpack.c.l.b16 %v73
    %v125 = vunpack.c.h.b16 %v73
    %v126 = vunpack.c.l.b16 %v74
    %v127 = vunpack.c.h.b16 %v74
    %v128 = vpack.c.b16 %v116, %v114
    %v129 = vpack.c.b16 %v117, %v115
    %v130 = vpack.c.b16 %v120, %v118
    %v131 = vpack.c.b16 %v121, %v119
    %v132 = vpack.c.b16 %v124, %v122
    %v133 = vpack.c.b16 %v125, %v123
    %v134 = vpack.c.b16 %v126, %v126
    %v135 = vpack.c.b16 %v127, %v127
    %vm142 = vcmask 416768
    %v144 = vsel %vm142, %v103, 0
    %v147 = vsel %vm142, %v104, 0
    %v150 = vsel %vm142, %v105, 0
    %v153 = vsel %vm142, %v106, 0
    %vm155 = vcmask 1040384
    %vm156 = vcmask 1041408
    %v157 = vsel %vm155, 4294967295, 65535
    %v158 = vsel %vm156, %v157, 0
    %v160 = vand.u32 %v134, %v158
    %v163 = vand.u32 %v135, %v158
    %165 = vmatprep.subr.bf16.mxu0 0
    %166 = vmatpush1.bf16.msra.mxu0 0
    %167 = vmatprep.subr.bf16.mxu0 0
    %168 = vmatpush1.bf16.msra.mxu0 0
    %169 = vmatprep.subr.bf16.mxu0 0
    %170 = vmatpush1.bf16.msra.mxu0 0
    %171 = vmatprep.subr.bf16.mxu0 0
    %172 = vmatpush1.bf16.msra.mxu0 0
    %173 = vmatprep.subr.bf16.mxu0 %v163
    %174 = vmatpush1.bf16.msra.mxu0 %v160
    %175 = vmatprep.subr.bf16.mxu0 %v133
    %176 = vmatpush1.bf16.msra.mxu0 %v132
    %177 = vmatprep.subr.bf16.mxu0 %v131
    %178 = vmatpush1.bf16.msra.mxu0 %v130
    %179 = vmatprep.subr.bf16.mxu0 %v129
    %180 = vmatpush1.bf16.msra.mxu0 %v128
    %181 = vmatprep.subr.bf16.mxu0 0
    %182 = vmatpush2.bf16.msra.mxu0 0
    %183 = vmatprep.subr.bf16.mxu0 0
    %184 = vmatpush2.bf16.msra.mxu0 0
    %185 = vmatprep.subr.bf16.mxu0 0
    %186 = vmatpush2.bf16.msra.mxu0 0
    %187 = vmatprep.subr.bf16.mxu0 0
    %188 = vmatpush2.bf16.msra.mxu0 0
    %189 = vmatprep.subr.bf16.mxu0 0
    %190 = vmatpush2.bf16.msra.mxu0 0
    %191 = vmatprep.subr.bf16.mxu0 0
    %192 = vmatpush2.bf16.msra.mxu0 0
    %193 = vmatprep.subr.bf16.mxu0 0
    %194 = vmatpush2.bf16.msra.mxu0 0
    %195 = vmatprep.subr.bf16.mxu0 0
    %196 = vmatpush2.bf16.msra.mxu0 0
    %197 = vmatprep.mubr.bf16.mxu0 0
    %198 = vmatmul.mubr.bf16.gmra.mxu0 %v144
    %v199 = vpop.f32.mrf.mxu0
    %v200 = vadd.f32 %v80, %v199
    %v201 = vpop.f32.mrf.mxu0
    %v202 = vadd.f32 %v84, %v201
    %v203 = vpop.f32.mrf.mxu0
    %v204 = vadd.f32 %v80, %v203
    %v205 = vpop.f32.mrf.mxu0
    %v206 = vadd.f32 %v84, %v205
    %207 = vmatprep.mubr.bf16.mxu0 0
    %208 = vmatmul.mubr.bf16.gmra.mxu0 %v147
    %v209 = vpop.f32.mrf.mxu0
    %v210 = vadd.f32 %v80, %v209
    %v211 = vpop.f32.mrf.mxu0
    %v212 = vadd.f32 %v84, %v211
    %v213 = vpop.f32.mrf.mxu0
    %v214 = vadd.f32 %v80, %v213
    %v215 = vpop.f32.mrf.mxu0
    %v216 = vadd.f32 %v84, %v215
    %217 = vmatprep.mubr.bf16.mxu0 0
    %218 = vmatmul.mubr.bf16.gmra.mxu0 %v150
    %v219 = vpop.f32.mrf.mxu0
    %v220 = vadd.f32 %v80, %v219
    %v221 = vpop.f32.mrf.mxu0
    %v222 = vadd.f32 %v84, %v221
    %v223 = vpop.f32.mrf.mxu0
    %v224 = vadd.f32 %v80, %v223
    %v225 = vpop.f32.mrf.mxu0
    %v226 = vadd.f32 %v84, %v225
    %227 = vmatprep.mubr.bf16.mxu0 0
    %228 = vmatmul.mubr.bf16.gmra.mxu0 %v153
    %v229 = vpop.f32.mrf.mxu0
    %v230 = vadd.f32 %v80, %v229
    %v231 = vpop.f32.mrf.mxu0
    %v232 = vadd.f32 %v84, %v231
    %v233 = vpop.f32.mrf.mxu0
    %v234 = vadd.f32 %v80, %v233
    %v235 = vpop.f32.mrf.mxu0
    %v236 = vadd.f32 %v84, %v235
    %237 = vdwg.mxu0
    %238 = vst [vmem:[#allocation2] sm:$0xff] %v200
    %239 = vst [vmem:[#allocation2 + $0x8] sm:$0xff] %v202
    %240 = vst [vmem:[#allocation2 + $0x10] sm:$0xff] %v204
    %241 = vst [vmem:[#allocation2 + $0x18] sm:$0xff] %v206
    %242 = vst [vmem:[#allocation2 + $0x20] sm:$0xff] %v210
    %243 = vst [vmem:[#allocation2 + $0x28] sm:$0xff] %v212
    %244 = vst [vmem:[#allocation2 + $0x30] sm:$0xff] %v214
    %245 = vst [vmem:[#allocation2 + $0x38] sm:$0xff] %v216
    %246 = vst [vmem:[#allocation2 + $0x40] sm:$0xff] %v220
    %247 = vst [vmem:[#allocation2 + $0x48] sm:$0xff] %v222
    %248 = vst [vmem:[#allocation2 + $0x50] sm:$0xff] %v224
    %249 = vst [vmem:[#allocation2 + $0x58] sm:$0xff] %v226
    %250 = vst [vmem:[#allocation2 + $0x60] sm:$0xff] %v230
    %251 = vst [vmem:[#allocation2 + $0x68] sm:$0xff] %v232
    %252 = vst [vmem:[#allocation2 + $0x70] sm:$0xff] %v234
    %253 = vst [vmem:[#allocation2 + $0x78] sm:$0xff] %v236
    %v254 = vld [vmem:[#allocation5] sm:$0xff]
    %v255 = vld [vmem:[#allocation5 + $0x8] sm:$0xff]
    %v256 = vld [vmem:[#allocation5 + $0x10] sm:$0xff]
    %v257 = vld [vmem:[#allocation5 + $0x18] sm:$0xff]
    %v258 = vld [vmem:[#allocation5 + $0x20] sm:$0xff]
    %v259 = vld [vmem:[#allocation5 + $0x28] sm:$0xff]
    %v260 = vld [vmem:[#allocation5 + $0x30] sm:$0xff]
    %v261 = vld [vmem:[#allocation5 + $0x38] sm:$0xff]
    %v262 = vld [vmem:[#allocation3] sm:$0xff]
    %v263 = vld [vmem:[#allocation4] sm:$0xff]
    %s264 = smul.u32 0, 2
    %s265 = smul.addr %s264, 8
    %s266 = scalar_lea.vmem [#allocation2], %s265
    %v267 = vld [vmem:[%s266] sm:$0xff]
    %v268 = vld [vmem:[%s266 + $0x8] sm:$0xff]
    %v269 = vpack.c.bf16 %v262, %v262
    %v278 = vunpack.c.l.b16 %v254
    %v279 = vunpack.c.h.b16 %v254
    %v280 = vunpack.c.l.b16 %v255
    %v281 = vunpack.c.h.b16 %v255
    %v282 = vunpack.c.l.b16 %v256
    %v283 = vunpack.c.h.b16 %v256
    %v284 = vunpack.c.l.b16 %v257
    %v285 = vunpack.c.h.b16 %v257
    %v286 = vunpack.c.l.b16 %v258
    %v287 = vunpack.c.h.b16 %v258
    %v288 = vunpack.c.l.b16 %v259
    %v289 = vunpack.c.h.b16 %v259
    %v290 = vunpack.c.l.b16 %v260
    %v291 = vunpack.c.h.b16 %v260
    %v292 = vunpack.c.l.b16 %v261
    %v293 = vunpack.c.h.b16 %v261
    %v294 = vpack.c.b16 %v280, %v278
    %v295 = vpack.c.b16 %v281, %v279
    %v296 = vpack.c.b16 %v284, %v282
    %v297 = vpack.c.b16 %v285, %v283
    %v298 = vpack.c.b16 %v288, %v286
    %v299 = vpack.c.b16 %v289, %v287
    %v300 = vpack.c.b16 %v292, %v290
    %v301 = vpack.c.b16 %v293, %v291
    %vm310 = vcmask 523264
    %v312 = vsel %vm310, %v269, 0
    %314 = vmatprep.subr.bf16.mxu0 0
    %315 = vmatpush1.bf16.msra.mxu0 0
    %316 = vmatprep.subr.bf16.mxu0 0
    %317 = vmatpush1.bf16.msra.mxu0 0
    %318 = vmatprep.subr.bf16.mxu0 0
    %319 = vmatpush1.bf16.msra.mxu0 0
    %320 = vmatprep.subr.bf16.mxu0 0
    %321 = vmatpush1.bf16.msra.mxu0 0
    %322 = vmatprep.subr.bf16.mxu0 %v301
    %323 = vmatpush1.bf16.msra.mxu0 %v300
    %324 = vmatprep.subr.bf16.mxu0 %v299
    %325 = vmatpush1.bf16.msra.mxu0 %v298
    %326 = vmatprep.subr.bf16.mxu0 %v297
    %327 = vmatpush1.bf16.msra.mxu0 %v296
    %328 = vmatprep.subr.bf16.mxu0 %v295
    %329 = vmatpush1.bf16.msra.mxu0 %v294
    %330 = vmatprep.subr.bf16.mxu0 0
    %331 = vmatpush2.bf16.msra.mxu0 0
    %332 = vmatprep.subr.bf16.mxu0 0
    %333 = vmatpush2.bf16.msra.mxu0 0
    %334 = vmatprep.subr.bf16.mxu0 0
    %335 = vmatpush2.bf16.msra.mxu0 0
    %336 = vmatprep.subr.bf16.mxu0 0
    %337 = vmatpush2.bf16.msra.mxu0 0
    %338 = vmatprep.subr.bf16.mxu0 0
    %339 = vmatpush2.bf16.msra.mxu0 0
    %340 = vmatprep.subr.bf16.mxu0 0
    %341 = vmatpush2.bf16.msra.mxu0 0
    %342 = vmatprep.subr.bf16.mxu0 0
    %343 = vmatpush2.bf16.msra.mxu0 0
    %344 = vmatprep.subr.bf16.mxu0 0
    %345 = vmatpush2.bf16.msra.mxu0 0
    %346 = vmatprep.mubr.bf16.mxu0 0
    %347 = vmatmul.mubr.bf16.gmra.mxu0 %v312
    %v348 = vpop.f32.mrf.mxu0
    %v349 = vadd.f32 0.0, %v348
    %v350 = vpop.f32.mrf.mxu0
    %v351 = vadd.f32 0.0, %v350
    %v352 = vpop.f32.mrf.mxu0
    %v353 = vpop.f32.mrf.mxu0
    %354 = vdwg.mxu0
    %v355 = vadd.f32 %v267, %v349
    %v356 = vadd.f32 %v268, %v351
    %v357 = vxor.u32 %v355, 2147483648
    %v358 = vxor.u32 %v356, 2147483648
    %v359 = vmul.f32 %v357, 1.442695
    %v360 = vpow.pop %v359
    %v361 = vmul.f32 %v358, 1.442695
    %v362 = vpow.pop %v361
    %v363 = vadd.f32 %v360, 1.0
    %v364 = vadd.f32 %v362, 1.0
    %v365 = vrcp.pop %v363
    %v366 = vmul.f32 1.0, %v365
    %v367 = vrcp.pop %v364
    %v368 = vmul.f32 1.0, %v367
    %v369 = vtanh.pop %v356
    %371 = vrot.lane.b32.xlu0 %v263, 64
    %v372 = vpop.permute.xlu0 %371
    %v374 = vmul.f32 %v366, %v372
    %376 = vrot.lane.b32.xlu0 %v369, 64
    %v377 = vpop.permute.xlu0 %376
    %v379 = vmul.f32 %v366, %v377
    %381 = vrot.lane.b32.xlu0 %v379, 64
    %v382 = vpop.permute.xlu0 %381
    %v384 = vadd.f32 %v374, %v382
    %v385 = vtanh.pop %v384
    %387 = vrot.lane.b32.xlu0 %v385, 64
    %v388 = vpop.permute.xlu0 %387
    %v390 = vmul.f32 %v368, %v388
    %s391 = smul.u32 1, 2
    %s392 = smul.addr %s391, 8
    %s393 = scalar_lea.vmem [#allocation2], %s392
    %v394 = vld [vmem:[%s393] sm:$0xff]
    %v395 = vld [vmem:[%s393 + $0x8] sm:$0xff]
    %v396 = vpack.c.bf16 %v390, %v390
    %v398 = vsel %vm310, %v396, 0
    %400 = vmatprep.subr.bf16.mxu0 0
    %401 = vmatpush1.bf16.msra.mxu0 0
    %402 = vmatprep.subr.bf16.mxu0 0
    %403 = vmatpush1.bf16.msra.mxu0 0
    %404 = vmatprep.subr.bf16.mxu0 0
    %405 = vmatpush1.bf16.msra.mxu0 0
    %406 = vmatprep.subr.bf16.mxu0 0
    %407 = vmatpush1.bf16.msra.mxu0 0
    %408 = vmatprep.subr.bf16.mxu0 %v301
    %409 = vmatpush1.bf16.msra.mxu0 %v300
    %410 = vmatprep.subr.bf16.mxu0 %v299
    %411 = vmatpush1.bf16.msra.mxu0 %v298
    %412 = vmatprep.subr.bf16.mxu0 %v297
    %413 = vmatpush1.bf16.msra.mxu0 %v296
    %414 = vmatprep.subr.bf16.mxu0 %v295
    %415 = vmatpush1.bf16.msra.mxu0 %v294
    %416 = vmatprep.subr.bf16.mxu0 0
    %417 = vmatpush2.bf16.msra.mxu0 0
    %418 = vmatprep.subr.bf16.mxu0 0
    %419 = vmatpush2.bf16.msra.mxu0 0
    %420 = vmatprep.subr.bf16.mxu0 0
    %421 = vmatpush2.bf16.msra.mxu0 0
    %422 = vmatprep.subr.bf16.mxu0 0
    %423 = vmatpush2.bf16.msra.mxu0 0
    %424 = vmatprep.subr.bf16.mxu0 0
    %425 = vmatpush2.bf16.msra.mxu0 0
    %426 = vmatprep.subr.bf16.mxu0 0
    %427 = vmatpush2.bf16.msra.mxu0 0
    %428 = vmatprep.subr.bf16.mxu0 0
    %429 = vmatpush2.bf16.msra.mxu0 0
    %430 = vmatprep.subr.bf16.mxu0 0
    %431 = vmatpush2.bf16.msra.mxu0 0
    %432 = vmatprep.mubr.bf16.mxu0 0
    %433 = vmatmul.mubr.bf16.gmra.mxu0 %v398
    %v434 = vpop.f32.mrf.mxu0
    %v435 = vadd.f32 0.0, %v434
    %v436 = vpop.f32.mrf.mxu0
    %v437 = vadd.f32 0.0, %v436
    %v438 = vpop.f32.mrf.mxu0
    %v439 = vpop.f32.mrf.mxu0
    %440 = vdwg.mxu0
    %v441 = vadd.f32 %v394, %v435
    %v442 = vadd.f32 %v395, %v437
    %v443 = vxor.u32 %v441, 2147483648
    %v444 = vxor.u32 %v442, 2147483648
    %v445 = vmul.f32 %v443, 1.442695
    %v446 = vpow.pop %v445
    %v447 = vmul.f32 %v444, 1.442695
    %v448 = vpow.pop %v447
    %v449 = vadd.f32 %v446, 1.0
    %v450 = vadd.f32 %v448, 1.0
    %v451 = vrcp.pop %v449
    %v452 = vmul.f32 1.0, %v451
    %v453 = vrcp.pop %v450
    %v454 = vmul.f32 1.0, %v453
    %v455 = vtanh.pop %v442
    %v456 = vmul.f32 %v452, %v384
    %458 = vrot.lane.b32.xlu0 %v455, 64
    %v459 = vpop.permute.xlu0 %458
    %v461 = vmul.f32 %v452, %v459
    %463 = vrot.lane.b32.xlu0 %v461, 64
    %v464 = vpop.permute.xlu0 %463
    %v466 = vadd.f32 %v456, %v464
    %v467 = vtanh.pop %v466
    %469 = vrot.lane.b32.xlu0 %v467, 64
    %v470 = vpop.permute.xlu0 %469
    %v472 = vmul.f32 %v454, %v470
    %s473 = smul.u32 2, 2
    %s474 = smul.addr %s473, 8
    %s475 = scalar_lea.vmem [#allocation2], %s474
    %v476 = vld [vmem:[%s475] sm:$0xff]
    %v477 = vld [vmem:[%s475 + $0x8] sm:$0xff]
    %v478 = vpack.c.bf16 %v472, %v472
    %v480 = vsel %vm310, %v478, 0
    %482 = vmatprep.subr.bf16.mxu0 0
    %483 = vmatpush1.bf16.msra.mxu0 0
    %484 = vmatprep.subr.bf16.mxu0 0
    %485 = vmatpush1.bf16.msra.mxu0 0
    %486 = vmatprep.subr.bf16.mxu0 0
    %487 = vmatpush1.bf16.msra.mxu0 0
    %488 = vmatprep.subr.bf16.mxu0 0
    %489 = vmatpush1.bf16.msra.mxu0 0
    %490 = vmatprep.subr.bf16.mxu0 %v301
    %491 = vmatpush1.bf16.msra.mxu0 %v300
    %492 = vmatprep.subr.bf16.mxu0 %v299
    %493 = vmatpush1.bf16.msra.mxu0 %v298
    %494 = vmatprep.subr.bf16.mxu0 %v297
    %495 = vmatpush1.bf16.msra.mxu0 %v296
    %496 = vmatprep.subr.bf16.mxu0 %v295
    %497 = vmatpush1.bf16.msra.mxu0 %v294
    %498 = vmatprep.subr.bf16.mxu0 0
    %499 = vmatpush2.bf16.msra.mxu0 0
    %500 = vmatprep.subr.bf16.mxu0 0
    %501 = vmatpush2.bf16.msra.mxu0 0
    %502 = vmatprep.subr.bf16.mxu0 0
    %503 = vmatpush2.bf16.msra.mxu0 0
    %504 = vmatprep.subr.bf16.mxu0 0
    %505 = vmatpush2.bf16.msra.mxu0 0
    %506 = vmatprep.subr.bf16.mxu0 0
    %507 = vmatpush2.bf16.msra.mxu0 0
    %508 = vmatprep.subr.bf16.mxu0 0
    %509 = vmatpush2.bf16.msra.mxu0 0
    %510 = vmatprep.subr.bf16.mxu0 0
    %511 = vmatpush2.bf16.msra.mxu0 0
    %512 = vmatprep.subr.bf16.mxu0 0
    %513 = vmatpush2.bf16.msra.mxu0 0
    %514 = vmatprep.mubr.bf16.mxu0 0
    %515 = vmatmul.mubr.bf16.gmra.mxu0 %v480
    %v516 = vpop.f32.mrf.mxu0
    %v517 = vadd.f32 0.0, %v516
    %v518 = vpop.f32.mrf.mxu0
    %v519 = vadd.f32 0.0, %v518
    %v520 = vpop.f32.mrf.mxu0
    %v521 = vpop.f32.mrf.mxu0
    %522 = vdwg.mxu0
    %v523 = vadd.f32 %v476, %v517
    %v524 = vadd.f32 %v477, %v519
    %v525 = vxor.u32 %v523, 2147483648
    %v526 = vxor.u32 %v524, 2147483648
    %v527 = vmul.f32 %v525, 1.442695
    %v528 = vpow.pop %v527
    %v529 = vmul.f32 %v526, 1.442695
    %v530 = vpow.pop %v529
    %v531 = vadd.f32 %v528, 1.0
    %v532 = vadd.f32 %v530, 1.0
    %v533 = vrcp.pop %v531
    %v534 = vmul.f32 1.0, %v533
    %v535 = vrcp.pop %v532
    %v536 = vmul.f32 1.0, %v535
    %v537 = vtanh.pop %v524
    %v538 = vmul.f32 %v534, %v466
    %540 = vrot.lane.b32.xlu0 %v537, 64
    %v541 = vpop.permute.xlu0 %540
    %v543 = vmul.f32 %v534, %v541
    %545 = vrot.lane.b32.xlu0 %v543, 64
    %v546 = vpop.permute.xlu0 %545
    %v548 = vadd.f32 %v538, %v546
    %v549 = vtanh.pop %v548
    %551 = vrot.lane.b32.xlu0 %v549, 64
    %v552 = vpop.permute.xlu0 %551
    %v554 = vmul.f32 %v536, %v552
    %s555 = smul.u32 3, 2
    %s556 = smul.addr %s555, 8
    %s557 = scalar_lea.vmem [#allocation2], %s556
    %v558 = vld [vmem:[%s557] sm:$0xff]
    %v559 = vld [vmem:[%s557 + $0x8] sm:$0xff]
    %v560 = vpack.c.bf16 %v554, %v554
    %v562 = vsel %vm310, %v560, 0
    %564 = vmatprep.subr.bf16.mxu0 0
    %565 = vmatpush1.bf16.msra.mxu0 0
    %566 = vmatprep.subr.bf16.mxu0 0
    %567 = vmatpush1.bf16.msra.mxu0 0
    %568 = vmatprep.subr.bf16.mxu0 0
    %569 = vmatpush1.bf16.msra.mxu0 0
    %570 = vmatprep.subr.bf16.mxu0 0
    %571 = vmatpush1.bf16.msra.mxu0 0
    %572 = vmatprep.subr.bf16.mxu0 %v301
    %573 = vmatpush1.bf16.msra.mxu0 %v300
    %574 = vmatprep.subr.bf16.mxu0 %v299
    %575 = vmatpush1.bf16.msra.mxu0 %v298
    %576 = vmatprep.subr.bf16.mxu0 %v297
    %577 = vmatpush1.bf16.msra.mxu0 %v296
    %578 = vmatprep.subr.bf16.mxu0 %v295
    %579 = vmatpush1.bf16.msra.mxu0 %v294
    %580 = vmatprep.subr.bf16.mxu0 0
    %581 = vmatpush2.bf16.msra.mxu0 0
    %582 = vmatprep.subr.bf16.mxu0 0
    %583 = vmatpush2.bf16.msra.mxu0 0
    %584 = vmatprep.subr.bf16.mxu0 0
    %585 = vmatpush2.bf16.msra.mxu0 0
    %586 = vmatprep.subr.bf16.mxu0 0
    %587 = vmatpush2.bf16.msra.mxu0 0
    %588 = vmatprep.subr.bf16.mxu0 0
    %589 = vmatpush2.bf16.msra.mxu0 0
    %590 = vmatprep.subr.bf16.mxu0 0
    %591 = vmatpush2.bf16.msra.mxu0 0
    %592 = vmatprep.subr.bf16.mxu0 0
    %593 = vmatpush2.bf16.msra.mxu0 0
    %594 = vmatprep.subr.bf16.mxu0 0
    %595 = vmatpush2.bf16.msra.mxu0 0
    %596 = vmatprep.mubr.bf16.mxu0 0
    %597 = vmatmul.mubr.bf16.gmra.mxu0 %v562
    %v598 = vpop.f32.mrf.mxu0
    %v599 = vadd.f32 0.0, %v598
    %v600 = vpop.f32.mrf.mxu0
    %v601 = vadd.f32 0.0, %v600
    %v602 = vpop.f32.mrf.mxu0
    %v603 = vpop.f32.mrf.mxu0
    %604 = vdwg.mxu0
    %v605 = vadd.f32 %v558, %v599
    %v606 = vadd.f32 %v559, %v601
    %v607 = vxor.u32 %v605, 2147483648
    %v608 = vxor.u32 %v606, 2147483648
    %v609 = vmul.f32 %v607, 1.442695
    %v610 = vpow.pop %v609
    %v611 = vmul.f32 %v608, 1.442695
    %v612 = vpow.pop %v611
    %v613 = vadd.f32 %v610, 1.0
    %v614 = vadd.f32 %v612, 1.0
    %v615 = vrcp.pop %v613
    %v616 = vmul.f32 1.0, %v615
    %v617 = vrcp.pop %v614
    %v618 = vmul.f32 1.0, %v617
    %v619 = vtanh.pop %v606
    %v620 = vmul.f32 %v616, %v548
    %622 = vrot.lane.b32.xlu0 %v619, 64
    %v623 = vpop.permute.xlu0 %622
    %v625 = vmul.f32 %v616, %v623
    %627 = vrot.lane.b32.xlu0 %v625, 64
    %v628 = vpop.permute.xlu0 %627
    %v630 = vadd.f32 %v620, %v628
    %v631 = vtanh.pop %v630
    %633 = vrot.lane.b32.xlu0 %v631, 64
    %v634 = vpop.permute.xlu0 %633
    %v636 = vmul.f32 %v618, %v634
    %s637 = smul.u32 4, 2
    %s638 = smul.addr %s637, 8
    %s639 = scalar_lea.vmem [#allocation2], %s638
    %v640 = vld [vmem:[%s639] sm:$0xff]
    %v641 = vld [vmem:[%s639 + $0x8] sm:$0xff]
    %v642 = vpack.c.bf16 %v636, %v636
    %v644 = vsel %vm310, %v642, 0
    %646 = vmatprep.subr.bf16.mxu0 0
    %647 = vmatpush1.bf16.msra.mxu0 0
    %648 = vmatprep.subr.bf16.mxu0 0
    %649 = vmatpush1.bf16.msra.mxu0 0
    %650 = vmatprep.subr.bf16.mxu0 0
    %651 = vmatpush1.bf16.msra.mxu0 0
    %652 = vmatprep.subr.bf16.mxu0 0
    %653 = vmatpush1.bf16.msra.mxu0 0
    %654 = vmatprep.subr.bf16.mxu0 %v301
    %655 = vmatpush1.bf16.msra.mxu0 %v300
    %656 = vmatprep.subr.bf16.mxu0 %v299
    %657 = vmatpush1.bf16.msra.mxu0 %v298
    %658 = vmatprep.subr.bf16.mxu0 %v297
    %659 = vmatpush1.bf16.msra.mxu0 %v296
    %660 = vmatprep.subr.bf16.mxu0 %v295
    %661 = vmatpush1.bf16.msra.mxu0 %v294
    %662 = vmatprep.subr.bf16.mxu0 0
    %663 = vmatpush2.bf16.msra.mxu0 0
    %664 = vmatprep.subr.bf16.mxu0 0
    %665 = vmatpush2.bf16.msra.mxu0 0
    %666 = vmatprep.subr.bf16.mxu0 0
    %667 = vmatpush2.bf16.msra.mxu0 0
    %668 = vmatprep.subr.bf16.mxu0 0
    %669 = vmatpush2.bf16.msra.mxu0 0
    %670 = vmatprep.subr.bf16.mxu0 0
    %671 = vmatpush2.bf16.msra.mxu0 0
    %672 = vmatprep.subr.bf16.mxu0 0
    %673 = vmatpush2.bf16.msra.mxu0 0
    %674 = vmatprep.subr.bf16.mxu0 0
    %675 = vmatpush2.bf16.msra.mxu0 0
    %676 = vmatprep.subr.bf16.mxu0 0
    %677 = vmatpush2.bf16.msra.mxu0 0
    %678 = vmatprep.mubr.bf16.mxu0 0
    %679 = vmatmul.mubr.bf16.gmra.mxu0 %v644
    %v680 = vpop.f32.mrf.mxu0
    %v681 = vadd.f32 0.0, %v680
    %v682 = vpop.f32.mrf.mxu0
    %v683 = vadd.f32 0.0, %v682
    %v684 = vpop.f32.mrf.mxu0
    %v685 = vpop.f32.mrf.mxu0
    %686 = vdwg.mxu0
    %v687 = vadd.f32 %v640, %v681
    %v688 = vadd.f32 %v641, %v683
    %v689 = vxor.u32 %v687, 2147483648
    %v690 = vxor.u32 %v688, 2147483648
    %v691 = vmul.f32 %v689, 1.442695
    %v692 = vpow.pop %v691
    %v693 = vmul.f32 %v690, 1.442695
    %v694 = vpow.pop %v693
    %v695 = vadd.f32 %v692, 1.0
    %v696 = vadd.f32 %v694, 1.0
    %v697 = vrcp.pop %v695
    %v698 = vmul.f32 1.0, %v697
    %v699 = vrcp.pop %v696
    %v700 = vmul.f32 1.0, %v699
    %v701 = vtanh.pop %v688
    %v702 = vmul.f32 %v698, %v630
    %704 = vrot.lane.b32.xlu0 %v701, 64
    %v705 = vpop.permute.xlu0 %704
    %v707 = vmul.f32 %v698, %v705
    %709 = vrot.lane.b32.xlu0 %v707, 64
    %v710 = vpop.permute.xlu0 %709
    %v712 = vadd.f32 %v702, %v710
    %v713 = vtanh.pop %v712
    %715 = vrot.lane.b32.xlu0 %v713, 64
    %v716 = vpop.permute.xlu0 %715
    %v718 = vmul.f32 %v700, %v716
    %s719 = smul.u32 5, 2
    %s720 = smul.addr %s719, 8
    %s721 = scalar_lea.vmem [#allocation2], %s720
    %v722 = vld [vmem:[%s721] sm:$0xff]
    %v723 = vld [vmem:[%s721 + $0x8] sm:$0xff]
    %v724 = vpack.c.bf16 %v718, %v718
    %v726 = vsel %vm310, %v724, 0
    %728 = vmatprep.subr.bf16.mxu0 0
    %729 = vmatpush1.bf16.msra.mxu0 0
    %730 = vmatprep.subr.bf16.mxu0 0
    %731 = vmatpush1.bf16.msra.mxu0 0
    %732 = vmatprep.subr.bf16.mxu0 0
    %733 = vmatpush1.bf16.msra.mxu0 0
    %734 = vmatprep.subr.bf16.mxu0 0
    %735 = vmatpush1.bf16.msra.mxu0 0
    %736 = vmatprep.subr.bf16.mxu0 %v301
    %737 = vmatpush1.bf16.msra.mxu0 %v300
    %738 = vmatprep.subr.bf16.mxu0 %v299
    %739 = vmatpush1.bf16.msra.mxu0 %v298
    %740 = vmatprep.subr.bf16.mxu0 %v297
    %741 = vmatpush1.bf16.msra.mxu0 %v296
    %742 = vmatprep.subr.bf16.mxu0 %v295
    %743 = vmatpush1.bf16.msra.mxu0 %v294
    %744 = vmatprep.subr.bf16.mxu0 0
    %745 = vmatpush2.bf16.msra.mxu0 0
    %746 = vmatprep.subr.bf16.mxu0 0
    %747 = vmatpush2.bf16.msra.mxu0 0
    %748 = vmatprep.subr.bf16.mxu0 0
    %749 = vmatpush2.bf16.msra.mxu0 0
    %750 = vmatprep.subr.bf16.mxu0 0
    %751 = vmatpush2.bf16.msra.mxu0 0
    %752 = vmatprep.subr.bf16.mxu0 0
    %753 = vmatpush2.bf16.msra.mxu0 0
    %754 = vmatprep.subr.bf16.mxu0 0
    %755 = vmatpush2.bf16.msra.mxu0 0
    %756 = vmatprep.subr.bf16.mxu0 0
    %757 = vmatpush2.bf16.msra.mxu0 0
    %758 = vmatprep.subr.bf16.mxu0 0
    %759 = vmatpush2.bf16.msra.mxu0 0
    %760 = vmatprep.mubr.bf16.mxu0 0
    %761 = vmatmul.mubr.bf16.gmra.mxu0 %v726
    %v762 = vpop.f32.mrf.mxu0
    %v763 = vadd.f32 0.0, %v762
    %v764 = vpop.f32.mrf.mxu0
    %v765 = vadd.f32 0.0, %v764
    %v766 = vpop.f32.mrf.mxu0
    %v767 = vpop.f32.mrf.mxu0
    %768 = vdwg.mxu0
    %v769 = vadd.f32 %v722, %v763
    %v770 = vadd.f32 %v723, %v765
    %v771 = vxor.u32 %v769, 2147483648
    %v772 = vxor.u32 %v770, 2147483648
    %v773 = vmul.f32 %v771, 1.442695
    %v774 = vpow.pop %v773
    %v775 = vmul.f32 %v772, 1.442695
    %v776 = vpow.pop %v775
    %v777 = vadd.f32 %v774, 1.0
    %v778 = vadd.f32 %v776, 1.0
    %v779 = vrcp.pop %v777
    %v780 = vmul.f32 1.0, %v779
    %v781 = vrcp.pop %v778
    %v782 = vmul.f32 1.0, %v781
    %v783 = vtanh.pop %v770
    %v784 = vmul.f32 %v780, %v712
    %786 = vrot.lane.b32.xlu0 %v783, 64
    %v787 = vpop.permute.xlu0 %786
    %v789 = vmul.f32 %v780, %v787
    %791 = vrot.lane.b32.xlu0 %v789, 64
    %v792 = vpop.permute.xlu0 %791
    %v794 = vadd.f32 %v784, %v792
    %v795 = vtanh.pop %v794
    %797 = vrot.lane.b32.xlu0 %v795, 64
    %v798 = vpop.permute.xlu0 %797
    %v800 = vmul.f32 %v782, %v798
    %s801 = smul.u32 6, 2
    %s802 = smul.addr %s801, 8
    %s803 = scalar_lea.vmem [#allocation2], %s802
    %v804 = vld [vmem:[%s803] sm:$0xff]
    %v805 = vld [vmem:[%s803 + $0x8] sm:$0xff]
    %v806 = vpack.c.bf16 %v800, %v800
    %v808 = vsel %vm310, %v806, 0
    %810 = vmatprep.subr.bf16.mxu0 0
    %811 = vmatpush1.bf16.msra.mxu0 0
    %812 = vmatprep.subr.bf16.mxu0 0
    %813 = vmatpush1.bf16.msra.mxu0 0
    %814 = vmatprep.subr.bf16.mxu0 0
    %815 = vmatpush1.bf16.msra.mxu0 0
    %816 = vmatprep.subr.bf16.mxu0 0
    %817 = vmatpush1.bf16.msra.mxu0 0
    %818 = vmatprep.subr.bf16.mxu0 %v301
    %819 = vmatpush1.bf16.msra.mxu0 %v300
    %820 = vmatprep.subr.bf16.mxu0 %v299
    %821 = vmatpush1.bf16.msra.mxu0 %v298
    %822 = vmatprep.subr.bf16.mxu0 %v297
    %823 = vmatpush1.bf16.msra.mxu0 %v296
    %824 = vmatprep.subr.bf16.mxu0 %v295
    %825 = vmatpush1.bf16.msra.mxu0 %v294
    %826 = vmatprep.subr.bf16.mxu0 0
    %827 = vmatpush2.bf16.msra.mxu0 0
    %828 = vmatprep.subr.bf16.mxu0 0
    %829 = vmatpush2.bf16.msra.mxu0 0
    %830 = vmatprep.subr.bf16.mxu0 0
    %831 = vmatpush2.bf16.msra.mxu0 0
    %832 = vmatprep.subr.bf16.mxu0 0
    %833 = vmatpush2.bf16.msra.mxu0 0
    %834 = vmatprep.subr.bf16.mxu0 0
    %835 = vmatpush2.bf16.msra.mxu0 0
    %836 = vmatprep.subr.bf16.mxu0 0
    %837 = vmatpush2.bf16.msra.mxu0 0
    %838 = vmatprep.subr.bf16.mxu0 0
    %839 = vmatpush2.bf16.msra.mxu0 0
    %840 = vmatprep.subr.bf16.mxu0 0
    %841 = vmatpush2.bf16.msra.mxu0 0
    %842 = vmatprep.mubr.bf16.mxu0 0
    %843 = vmatmul.mubr.bf16.gmra.mxu0 %v808
    %v844 = vpop.f32.mrf.mxu0
    %v845 = vadd.f32 0.0, %v844
    %v846 = vpop.f32.mrf.mxu0
    %v847 = vadd.f32 0.0, %v846
    %v848 = vpop.f32.mrf.mxu0
    %v849 = vpop.f32.mrf.mxu0
    %850 = vdwg.mxu0
    %v851 = vadd.f32 %v804, %v845
    %v852 = vadd.f32 %v805, %v847
    %v853 = vxor.u32 %v851, 2147483648
    %v854 = vxor.u32 %v852, 2147483648
    %v855 = vmul.f32 %v853, 1.442695
    %v856 = vpow.pop %v855
    %v857 = vmul.f32 %v854, 1.442695
    %v858 = vpow.pop %v857
    %v859 = vadd.f32 %v856, 1.0
    %v860 = vadd.f32 %v858, 1.0
    %v861 = vrcp.pop %v859
    %v862 = vmul.f32 1.0, %v861
    %v863 = vrcp.pop %v860
    %v864 = vmul.f32 1.0, %v863
    %v865 = vtanh.pop %v852
    %v866 = vmul.f32 %v862, %v794
    %868 = vrot.lane.b32.xlu0 %v865, 64
    %v869 = vpop.permute.xlu0 %868
    %v871 = vmul.f32 %v862, %v869
    %873 = vrot.lane.b32.xlu0 %v871, 64
    %v874 = vpop.permute.xlu0 %873
    %v876 = vadd.f32 %v866, %v874
    %v877 = vtanh.pop %v876
    %879 = vrot.lane.b32.xlu0 %v877, 64
    %v880 = vpop.permute.xlu0 %879
    %v882 = vmul.f32 %v864, %v880
    %s883 = smul.u32 7, 2
    %s884 = smul.addr %s883, 8
    %s885 = scalar_lea.vmem [#allocation2], %s884
    %v886 = vld [vmem:[%s885] sm:$0xff]
    %v887 = vld [vmem:[%s885 + $0x8] sm:$0xff]
    %v888 = vpack.c.bf16 %v882, %v882
    %v890 = vsel %vm310, %v888, 0
    %892 = vmatprep.subr.bf16.mxu0 0
    %893 = vmatpush1.bf16.msra.mxu0 0
    %894 = vmatprep.subr.bf16.mxu0 0
    %895 = vmatpush1.bf16.msra.mxu0 0
    %896 = vmatprep.subr.bf16.mxu0 0
    %897 = vmatpush1.bf16.msra.mxu0 0
    %898 = vmatprep.subr.bf16.mxu0 0
    %899 = vmatpush1.bf16.msra.mxu0 0
    %900 = vmatprep.subr.bf16.mxu0 %v301
    %901 = vmatpush1.bf16.msra.mxu0 %v300
    %902 = vmatprep.subr.bf16.mxu0 %v299
    %903 = vmatpush1.bf16.msra.mxu0 %v298
    %904 = vmatprep.subr.bf16.mxu0 %v297
    %905 = vmatpush1.bf16.msra.mxu0 %v296
    %906 = vmatprep.subr.bf16.mxu0 %v295
    %907 = vmatpush1.bf16.msra.mxu0 %v294
    %908 = vmatprep.subr.bf16.mxu0 0
    %909 = vmatpush2.bf16.msra.mxu0 0
    %910 = vmatprep.subr.bf16.mxu0 0
    %911 = vmatpush2.bf16.msra.mxu0 0
    %912 = vmatprep.subr.bf16.mxu0 0
    %913 = vmatpush2.bf16.msra.mxu0 0
    %914 = vmatprep.subr.bf16.mxu0 0
    %915 = vmatpush2.bf16.msra.mxu0 0
    %916 = vmatprep.subr.bf16.mxu0 0
    %917 = vmatpush2.bf16.msra.mxu0 0
    %918 = vmatprep.subr.bf16.mxu0 0
    %919 = vmatpush2.bf16.msra.mxu0 0
    %920 = vmatprep.subr.bf16.mxu0 0
    %921 = vmatpush2.bf16.msra.mxu0 0
    %922 = vmatprep.subr.bf16.mxu0 0
    %923 = vmatpush2.bf16.msra.mxu0 0
    %924 = vmatprep.mubr.bf16.mxu0 0
    %925 = vmatmul.mubr.bf16.gmra.mxu0 %v890
    %v926 = vpop.f32.mrf.mxu0
    %v927 = vadd.f32 0.0, %v926
    %v928 = vpop.f32.mrf.mxu0
    %v929 = vadd.f32 0.0, %v928
    %v930 = vpop.f32.mrf.mxu0
    %v931 = vpop.f32.mrf.mxu0
    %932 = vdwg.mxu0
    %v933 = vadd.f32 %v886, %v927
    %v934 = vadd.f32 %v887, %v929
    %v935 = vxor.u32 %v933, 2147483648
    %v936 = vxor.u32 %v934, 2147483648
    %v937 = vmul.f32 %v935, 1.442695
    %v938 = vpow.pop %v937
    %v939 = vmul.f32 %v936, 1.442695
    %v940 = vpow.pop %v939
    %v941 = vadd.f32 %v938, 1.0
    %v942 = vadd.f32 %v940, 1.0
    %v943 = vrcp.pop %v941
    %v944 = vmul.f32 1.0, %v943
    %v945 = vrcp.pop %v942
    %v946 = vmul.f32 1.0, %v945
    %v947 = vtanh.pop %v934
    %v948 = vmul.f32 %v944, %v876
    %950 = vrot.lane.b32.xlu0 %v947, 64
    %v951 = vpop.permute.xlu0 %950
    %v953 = vmul.f32 %v944, %v951
    %955 = vrot.lane.b32.xlu0 %v953, 64
    %v956 = vpop.permute.xlu0 %955
    %v958 = vadd.f32 %v948, %v956
    %v959 = vtanh.pop %v958
    %961 = vrot.lane.b32.xlu0 %v959, 64
    %v962 = vpop.permute.xlu0 %961
    %v964 = vmul.f32 %v946, %v962
    %965 = vst.msk [vmem:[#allocation3] sm:$0xff] %vm310, %v964
    %967 = vrot.lane.b32.xlu0 %v958, 64
    %v968 = vpop.permute.xlu0 %967
    %970 = vst.msk [vmem:[#allocation4] sm:$0xff] %vm310, %v968
    // Predicated region
    $region38: #{tpu_custom_call.1} parent=1 // pred_check
      %p971 = pneg %p53
    $region39: #{tpu_custom_call.1} parent=1 // pred_check_branch
      %973 = sbr.rel (%p971) target = $region41
    $region40: #{tpu_custom_call.1} parent=1 // pred_region
      %v974 = vpack.c.bf16 %v964, %v964
      %v975 = vld [vmem:[#allocation8] sm:$0xf]
      %v976 = vld [vmem:[#allocation8 + $0x4] sm:$0xf]
      %v977 = vld [vmem:[#allocation8 + $0x8] sm:$0xf]
      %v978 = vld [vmem:[#allocation8 + $0xc] sm:$0xf]
      %v979 = vld [vmem:[#allocation8 + $0x10] sm:$0xf]
      %v980 = vld [vmem:[#allocation8 + $0x14] sm:$0xf]
      %v981 = vld [vmem:[#allocation8 + $0x18] sm:$0xf]
      %v982 = vld [vmem:[#allocation8 + $0x1c] sm:$0xf]
      %v983 = vld [vmem:[%s5] sm:$0x1]
      %v985 = vlaneseq
      %v986 = vshrl.u32 %v985, 7
      %v987 = vsub.s32 0, %v986
      %v988 = vrot.slane %v983, %v987
      %v998 = vunpack.c.l.b16 %v975
      %v999 = vunpack.c.l.b16 %v976
      %v1000 = vunpack.c.l.b16 %v977
      %v1001 = vunpack.c.l.b16 %v978
      %v1002 = vunpack.c.l.b16 %v979
      %v1003 = vunpack.c.l.b16 %v980
      %v1004 = vunpack.c.l.b16 %v981
      %v1005 = vunpack.c.l.b16 %v982
      %v1006 = vpack.c.b16 %v999, %v998
      %v1007 = vpack.c.b16 %v1001, %v1000
      %v1008 = vpack.c.b16 %v1003, %v1002
      %v1009 = vpack.c.b16 %v1005, %v1004
      %v1015 = vsel %vm310, %v974, 0
      %1017 = vmatprep.subr.bf16.mxu0 0
      %1018 = vmatpush1.bf16.msra.mxu0 0
      %1019 = vmatprep.subr.bf16.mxu0 0
      %1020 = vmatpush1.bf16.msra.mxu0 0
      %1021 = vmatprep.subr.bf16.mxu0 0
      %1022 = vmatpush1.bf16.msra.mxu0 0
      %1023 = vmatprep.subr.bf16.mxu0 0
      %1024 = vmatpush1.bf16.msra.mxu0 0
      %1025 = vmatprep.subr.bf16.mxu0 0
      %1026 = vmatpush1.bf16.msra.mxu0 %v1009
      %1027 = vmatprep.subr.bf16.mxu0 0
      %1028 = vmatpush1.bf16.msra.mxu0 %v1008
      %1029 = vmatprep.subr.bf16.mxu0 0
      %1030 = vmatpush1.bf16.msra.mxu0 %v1007
      %1031 = vmatprep.subr.bf16.mxu0 0
      %1032 = vmatpush1.bf16.msra.mxu0 %v1006
      %1033 = vmatprep.subr.bf16.mxu0 0
      %1034 = vmatpush2.bf16.msra.mxu0 0
      %1035 = vmatprep.subr.bf16.mxu0 0
      %1036 = vmatpush2.bf16.msra.mxu0 0
      %1037 = vmatprep.subr.bf16.mxu0 0
      %1038 = vmatpush2.bf16.msra.mxu0 0
      %1039 = vmatprep.subr.bf16.mxu0 0
      %1040 = vmatpush2.bf16.msra.mxu0 0
      %1041 = vmatprep.subr.bf16.mxu0 0
      %1042 = vmatpush2.bf16.msra.mxu0 0
      %1043 = vmatprep.subr.bf16.mxu0 0
      %1044 = vmatpush2.bf16.msra.mxu0 0
      %1045 = vmatprep.subr.bf16.mxu0 0
      %1046 = vmatpush2.bf16.msra.mxu0 0
      %1047 = vmatprep.subr.bf16.mxu0 0
      %1048 = vmatpush2.bf16.msra.mxu0 0
      %1049 = vmatprep.mubr.bf16.mxu0 0
      %1050 = vmatmul.mubr.bf16.gmra.mxu0 %v1015
      %v1051 = vpop.f32.mrf.mxu0
      %v1052 = vadd.f32 %v988, %v1051
      %v1053 = vpop.f32.mrf.mxu0
      %v1054 = vpop.f32.mrf.mxu0
      %v1055 = vpop.f32.mrf.mxu0
      %1056 = vdwg.mxu0
      %1057 = vst [vmem:[#allocation10] sm:$0xff] %v1052
    $region41: #{tpu_custom_call.1} parent=1 // pred_fallthru
      _
    // Predicated region
    $region42: #{tpu_custom_call.1} parent=1 // pred_check
      _
    $region43: #{tpu_custom_call.1} parent=1 // pred_check_branch
      %1059 = sbr.rel (0) target = $region45
    $region44: #{tpu_custom_call.1} parent=1 // pred_region
      %s1061 = ssub.s32 128, 128
      %1062 = vsyncadd [#allocation7], %s1061
      %s1064 = sshll.u32 [#allocation10], 4
      %s1065 = int_to_ptr.vmem [resolvable:$true] %s1064
      %1067 = dma.vmem_to_hbm [thread:$0]  %s1065, 128, %s6, [#allocation7]
    $region45: #{tpu_custom_call.1} parent=1 // pred_fallthru
      _
    // Predicated region
    $region46: #{tpu_custom_call.1} parent=1 // pred_check
      _
    $region47: #{tpu_custom_call.1} parent=1 // pred_check_branch
      %1069 = sbr.rel (0) target = $region49
    $region48: #{tpu_custom_call.1} parent=1 // pred_region
      %1070 = dma.done [#allocation7], 128
    $region49: #{tpu_custom_call.1} parent=1 // pred_fallthru
      _
    %1071 = vsyncpa [#allocation6], 1
    %1072 = vsyncpa [#allocation9], 1
    %1073 = vsyncpa [#allocation7], 1

</llo_original>
